<compile_context>
chip_gen: v7x
topology: tpu7x:2x2x1
jax: 0.10.0
libtpu: 0.0.40
codegen_flags: <defaults>
</compile_context>

<pallas_src>
import jax
import jax.numpy as jnp
from jax.experimental import pallas as pl
from jax.experimental.pallas import tpu as pltpu


def _round_up(x, m):
    return (x + m - 1) // m * m


# ---------------------------------------------------------------------------
# Kernel
# ---------------------------------------------------------------------------
def fc_block_kernel(
    x_ref,       # (TN, Fp_in)             f32
    scale1_ref,  # (1, Fp_in)              f32  folded bn1 scale
    shift1_ref,  # (1, Fp_in)              f32  folded bn1 shift
    w1_ref,      # (Fp_in, Fp_out)         bf16 FCL1 weight^T with bn2 folded in
    b1_ref,      # (1, Fp_out)             f32  FCL1 bias with bn2 folded in
    wcat_ref,    # (Fp_out+Fp_in, Fp_out)  bf16 concat([FCL2 w^T, downsample w^T])
    bcat_ref,    # (1, Fp_out)             f32  FCL2 bias + downsample bias
    o_ref,       # (TN, Fp_out)            f32
):
    x = x_ref[...]

    # ---- bn1 (eval: folded running stats) + SiLU (VPU/EUP, f32) -----------
    h = x * scale1_ref[...] + shift1_ref[...]
    h = h * jax.nn.sigmoid(h)

    # ---- FCL1 with bn2 affine folded in (bf16 MXU, f32 accumulation) ------
    y1 = jnp.dot(h.astype(jnp.bfloat16), w1_ref[...],
                 preferred_element_type=jnp.float32) + b1_ref[...]

    # ---- SiLU (dropout is identity in eval mode) ---------------------------
    h2 = y1 * jax.nn.sigmoid(y1)

    # ---- fused FCL2 + identity_downsample + residual add -------------------
    #   y2 + idn = [h2, x] @ [[w2^T], [wd^T]] + (b2 + bd)
    cat = jnp.concatenate(
        [h2.astype(jnp.bfloat16), x.astype(jnp.bfloat16)], axis=-1)
    o_ref[...] = jnp.dot(cat, wcat_ref[...],
                         preferred_element_type=jnp.float32) + bcat_ref[...]


# ---------------------------------------------------------------------------
# Wrapper
# ---------------------------------------------------------------------------
def fc_block(x, fp, *, tile_n=256):
    """x: (N, F_in) float32. fp: dict from fold_params()."""
    N, f_in = x.shape
    assert f_in == fp["f_in"]
    f_out = fp["f_out"]
    fp_in = fp["scale1"].shape[1]
    fp_out = fp["b1"].shape[1]

    n_pad = _round_up(N, tile_n)
    # Zero-pad batch rows + feature columns (exact: padded features carry zero
    # scale/shift/weights/bias; padded rows are sliced off below).
    xp = jnp.zeros((n_pad, fp_in), x.dtype).at[:N, :f_in].set(x)

    grid = (n_pad // tile_n,)

    row_map = lambda i: (i, 0)
    bcast_map = lambda i: (0, 0)
    full = lambda arr: pl.BlockSpec(arr.shape, bcast_map)

    flops = 2 * n_pad * (fp_in * fp_out + (fp_in + fp_out) * fp_out)
    transcendentals = n_pad * (fp_in + fp_out)  # two SiLU sigmoids
    bytes_accessed = (
        4 * n_pad * (fp_in + fp_out)                        # x in, out
        + 2 * (fp_in * fp_out + (fp_in + fp_out) * fp_out)  # bf16 weights
        + 4 * (2 * fp_in + 2 * fp_out)                      # scales / biases
    )

    out = pl.pallas_call(
        fc_block_kernel,
        out_shape=jax.ShapeDtypeStruct((n_pad, fp_out), jnp.float32),
        grid_spec=pltpu.PrefetchScalarGridSpec(
            num_scalar_prefetch=0,
            grid=grid,
            in_specs=[
                pl.BlockSpec((tile_n, fp_in), row_map),   # x
                full(fp["scale1"]),                       # bn1 scale
                full(fp["shift1"]),                       # bn1 shift
                full(fp["w1"]),                           # FCL1 (bn2 folded)
                full(fp["b1"]),
                full(fp["w_cat"]),                        # FCL2 + downsample
                full(fp["b_cat"]),
            ],
            out_specs=pl.BlockSpec((tile_n, fp_out), row_map),
        ),
        compiler_params=pltpu.CompilerParams(
            dimension_semantics=("parallel",),
            vmem_limit_bytes=48 * 1024 * 1024,
        ),
        cost_estimate=pl.CostEstimate(
            flops=flops,
            transcendentals=transcendentals,
            bytes_accessed=bytes_accessed,
        ),
    )(xp, fp["scale1"], fp["shift1"], fp["w1"], fp["b1"],
      fp["w_cat"], fp["b_cat"])

    return out[:N, :f_out]


# ---------------------------------------------------------------------------
# Parameter folding (BN fold, bn2->FCL1 fold, FCL2+downsample fusion, padding)
# ---------------------------------------------------------------------------
def fold_params(raw, *, eps=1e-5, lane=128):
    w1, b1 = raw["w1"], raw["b1"]          # (F_out, F_in), (F_out,)
    w2, b2 = raw["w2"], raw["b2"]          # (F_out, F_out), (F_out,)
    f_out, f_in = w1.shape

    # identity_downsample: Linear if F_in != F_out, else exact identity.
    if raw.get("wd") is not None:
        wd, bd = raw["wd"], raw["bd"]
    else:
        wd = jnp.eye(f_in, dtype=jnp.float32)
        bd = jnp.zeros((f_out,), jnp.float32)

    # Fold BatchNorm1d (eval) into per-feature affine: y = x * scale + shift.
    scale1 = raw["g1"] / jnp.sqrt(raw["rv1"] + eps)
    shift1 = raw["be1"] - raw["rm1"] * scale1
    scale2 = raw["g2"] / jnp.sqrt(raw["rv2"] + eps)
    shift2 = raw["be2"] - raw["rm2"] * scale2

    # Fold bn2 into FCL1 (exact algebra: matmul is linear).
    w1f = w1.T * scale2[None, :]           # (F_in, F_out)
    b1f = b1 * scale2 + shift2             # (F_out,)

    fp_in = max(_round_up(f_in, lane), lane)
    fp_out = max(_round_up(f_out, lane), lane)

    def pad2(a, rows, cols):
        out = jnp.zeros((rows, cols), a.dtype)
        return out.at[: a.shape[0], : a.shape[1]].set(a)

    def pad_row(a, cols):
        out = jnp.zeros((1, cols), a.dtype)
        return out.at[0, : a.shape[0]].set(a)

    w1_p = pad2(w1f, fp_in, fp_out).astype(jnp.bfloat16)
    w2_p = pad2(w2.T, fp_out, fp_out)
    wd_p = pad2(wd.T, fp_in, fp_out)
    w_cat = jnp.concatenate([w2_p, wd_p], axis=0).astype(jnp.bfloat16)

    return {
        "f_in": f_in, "f_out": f_out,
        "scale1": pad_row(scale1, fp_in),
        "shift1": pad_row(shift1, fp_in),
        "w1": w1_p,
        "b1": pad_row(b1f, fp_out),
        "w_cat": w_cat,
        "b_cat": pad_row(b2 + bd, fp_out),
    }


# ---------------------------------------------------------------------------
# Synthetic PyTorch-like parameters and a pure-JAX reference
# ---------------------------------------------------------------------------
def make_raw_params(key, in_features, out_features):
    ks = jax.random.split(key, 14)

    def linear_init(kw, kb, fan_in, fan_out):
        bound = 1.0 / (fan_in ** 0.5)
        w = jax.random.uniform(kw, (fan_out, fan_in), jnp.float32, -bound, bound)
        b = jax.random.uniform(kb, (fan_out,), jnp.float32, -bound, bound)
        return w, b

    w1, b1 = linear_init(ks[0], ks[1], in_features, out_features)
    w2, b2 = linear_init(ks[2], ks[3], out_features, out_features)
    if in_features != out_features:
        wd, bd = linear_init(ks[4], ks[5], in_features, out_features)
    else:
        wd, bd = None, None

    def bn_params(kg, kb, km, kv, n):
        g = 1.0 + 0.1 * jax.random.normal(kg, (n,), jnp.float32)
        be = 0.1 * jax.random.normal(kb, (n,), jnp.float32)
        rm = 0.1 * jax.random.normal(km, (n,), jnp.float32)
        rv = 1.0 + 0.25 * jax.random.uniform(kv, (n,), jnp.float32)
        return g, be, rm, rv

    g1, be1, rm1, rv1 = bn_params(ks[6], ks[7], ks[8], ks[9], in_features)
    g2, be2, rm2, rv2 = bn_params(ks[10], ks[11], ks[12], ks[13], out_features)

    return {
        "w1": w1, "b1": b1, "w2": w2, "b2": b2, "wd": wd, "bd": bd,
        "g1": g1, "be1": be1, "rm1": rm1, "rv1": rv1,
        "g2": g2, "be2": be2, "rm2": rm2, "rv2": rv2,
    }


def fc_block_ref(x, raw, eps=1e-5):
    """Pure-JAX f32 reference (eval-mode FCBlock)."""
    def bn(v, g, b, rm, rv):
        return (v - rm) / jnp.sqrt(rv + eps) * g + b

    h = bn(x, raw["g1"], raw["be1"], raw["rm1"], raw["rv1"])
    h = h * jax.nn.sigmoid(h)
    y1 = h @ raw["w1"].T + raw["b1"]
    h2 = bn(y1, raw["g2"], raw["be2"], raw["rm2"], raw["rv2"])
    h2 = h2 * jax.nn.sigmoid(h2)
    y2 = h2 @ raw["w2"].T + raw["b2"]          # dropout == identity in eval
    if raw.get("wd") is not None:
        idn = x @ raw["wd"].T + raw["bd"]
    else:
        idn = x
    return y2 + idn


if __name__ == "__main__":
    key = jax.random.PRNGKey(0)
    k_x, k_p = jax.random.split(key)

    # Small demo shapes; deliberately non-aligned to exercise the padding path
    # (features padded to 128/256 lanes, rows padded to the 256-row tile).
    N, F_IN, F_OUT = 500, 96, 192
    x = jax.random.normal(k_x, (N, F_IN), dtype=jnp.float32)

    raw = make_raw_params(k_p, F_IN, F_OUT)
    folded = fold_params(raw)

    out = fc_block(x, folded, tile_n=256)
    out = jax.block_until_ready(out)

    ref = fc_block_ref(x, raw)
    assert out.shape == (N, F_OUT)
    # bf16 matmul inputs with f32 accumulation -> loosened tolerance.
    assert jnp.allclose(out, ref, atol=5e-2, rtol=5e-2)

    print("KERNEL_OK")
</pallas_src>

<mosaic_0001>
module attributes {stable_mosaic.version = 11 : i64} {
  func.func @fc_block_kernel(%arg0: i32, %arg1: memref<256x128xf32, #tpu.memory_space<vmem>>, %arg2: memref<1x128xf32, #tpu.memory_space<vmem>>, %arg3: memref<1x128xf32, #tpu.memory_space<vmem>>, %arg4: memref<128x256xbf16, #tpu.memory_space<vmem>>, %arg5: memref<1x256xf32, #tpu.memory_space<vmem>>, %arg6: memref<384x256xbf16, #tpu.memory_space<vmem>>, %arg7: memref<1x256xf32, #tpu.memory_space<vmem>>, %arg8: memref<256x256xf32, #tpu.memory_space<vmem>>) attributes {dimension_semantics = [#tpu.dimension_semantics<parallel>], iteration_bounds = array<i64: 2>, scalar_prefetch = 0 : i64, scratch_operands = 0 : i64, tpu.core_type = #tpu.core_type<tc>, window_params = [{transform_indices = @transform_0, window_bounds = array<i64: 256, 128>}, {pipeline_mode = #tpu.pipeline_mode<synchronous>, transform_indices = @transform_1, window_bounds = array<i64: 1, 128>}, {pipeline_mode = #tpu.pipeline_mode<synchronous>, transform_indices = @transform_2, window_bounds = array<i64: 1, 128>}, {pipeline_mode = #tpu.pipeline_mode<synchronous>, transform_indices = @transform_3, window_bounds = array<i64: 128, 256>}, {pipeline_mode = #tpu.pipeline_mode<synchronous>, transform_indices = @transform_4, window_bounds = array<i64: 1, 256>}, {pipeline_mode = #tpu.pipeline_mode<synchronous>, transform_indices = @transform_5, window_bounds = array<i64: 384, 256>}, {pipeline_mode = #tpu.pipeline_mode<synchronous>, transform_indices = @transform_6, window_bounds = array<i64: 1, 256>}, {transform_indices = @transform_7, window_bounds = array<i64: 256, 256>}]} {
    %c0 = arith.constant 0 : index
    %c0_0 = arith.constant 0 : index
    %0 = vector.load %arg1[%c0, %c0_0] : memref<256x128xf32, #tpu.memory_space<vmem>>, vector<256x128xf32>
    %c0_1 = arith.constant 0 : index
    %c0_2 = arith.constant 0 : index
    %1 = vector.load %arg2[%c0_1, %c0_2] : memref<1x128xf32, #tpu.memory_space<vmem>>, vector<1x128xf32>
    %2 = vector.broadcast %1 : vector<1x128xf32> to vector<256x128xf32>
    %3 = arith.mulf %0, %2 : vector<256x128xf32>
    %c0_3 = arith.constant 0 : index
    %c0_4 = arith.constant 0 : index
    %4 = vector.load %arg3[%c0_3, %c0_4] : memref<1x128xf32, #tpu.memory_space<vmem>>, vector<1x128xf32>
    %5 = vector.broadcast %4 : vector<1x128xf32> to vector<256x128xf32>
    %6 = arith.addf %3, %5 : vector<256x128xf32>
    %7 = arith.negf %6 : vector<256x128xf32>
    %8 = math.exp %7 : vector<256x128xf32>
    %cst = arith.constant 1.000000e+00 : f32
    %9 = vector.broadcast %cst : f32 to vector<256x128xf32>
    %10 = arith.addf %9, %8 : vector<256x128xf32>
    %11 = arith.divf %9, %10 : vector<256x128xf32>
    %12 = arith.mulf %6, %11 : vector<256x128xf32>
    %13 = arith.truncf %12 : vector<256x128xf32> to vector<256x128xbf16>
    %c0_5 = arith.constant 0 : index
    %c0_6 = arith.constant 0 : index
    %14 = vector.load %arg4[%c0_5, %c0_6] : memref<128x256xbf16, #tpu.memory_space<vmem>>, vector<128x256xbf16>
    %cst_7 = arith.constant dense<0.000000e+00> : vector<256x256xf32>
    %15 = tpu.matmul %13, %14, %cst_7 {dimension_numbers = #tpu.dot_dimension_numbers<[1], [0], [0], [1], [0, 0, 1, 1], [], []>} : vector<256x128xbf16>, vector<128x256xbf16>, vector<256x256xf32> -> vector<256x256xf32>
    %c0_8 = arith.constant 0 : index
    %c0_9 = arith.constant 0 : index
    %16 = vector.load %arg5[%c0_8, %c0_9] : memref<1x256xf32, #tpu.memory_space<vmem>>, vector<1x256xf32>
    %17 = vector.broadcast %16 : vector<1x256xf32> to vector<256x256xf32>
    %18 = arith.addf %15, %17 : vector<256x256xf32>
    %19 = arith.negf %18 : vector<256x256xf32>
    %20 = math.exp %19 : vector<256x256xf32>
    %cst_10 = arith.constant 1.000000e+00 : f32
    %21 = vector.broadcast %cst_10 : f32 to vector<256x256xf32>
    %22 = arith.addf %21, %20 : vector<256x256xf32>
    %23 = arith.divf %21, %22 : vector<256x256xf32>
    %24 = arith.mulf %18, %23 : vector<256x256xf32>
    %25 = arith.truncf %24 : vector<256x256xf32> to vector<256x256xbf16>
    %26 = arith.truncf %0 : vector<256x128xf32> to vector<256x128xbf16>
    %27 = tpu.concatenate %25, %26 in 1 : vector<256x256xbf16>, vector<256x128xbf16> -> vector<256x384xbf16>
    %c0_11 = arith.constant 0 : index
    %c0_12 = arith.constant 0 : index
    %28 = vector.load %arg6[%c0_11, %c0_12] : memref<384x256xbf16, #tpu.memory_space<vmem>>, vector<384x256xbf16>
    %cst_13 = arith.constant dense<0.000000e+00> : vector<256x256xf32>
    %29 = tpu.matmul %27, %28, %cst_13 {dimension_numbers = #tpu.dot_dimension_numbers<[1], [0], [0], [1], [0, 0, 1, 1], [], []>} : vector<256x384xbf16>, vector<384x256xbf16>, vector<256x256xf32> -> vector<256x256xf32>
    %c0_14 = arith.constant 0 : index
    %c0_15 = arith.constant 0 : index
    %30 = vector.load %arg7[%c0_14, %c0_15] : memref<1x256xf32, #tpu.memory_space<vmem>>, vector<1x256xf32>
    %31 = vector.broadcast %30 : vector<1x256xf32> to vector<256x256xf32>
    %32 = arith.addf %29, %31 : vector<256x256xf32>
    %c0_16 = arith.constant 0 : index
    %c0_17 = arith.constant 0 : index
    %33 = vector.load %arg8[%c0_16, %c0_17] : memref<256x256xf32, #tpu.memory_space<vmem>>, vector<256x256xf32>
    tpu.vector_store %arg8[%c0_16, %c0_17], %32 {strides = array<i32>} : memref<256x256xf32, #tpu.memory_space<vmem>>, vector<256x256xf32>,
    return
  }
  func.func @transform_0(%arg0: i32) -> (i32, i32) {
    %c0_i32 = arith.constant 0 : i32
    %c0_i32_0 = arith.constant 0 : i32
    return %arg0, %c0_i32 : i32, i32
  }
  func.func @transform_1(%arg0: i32) -> (i32, i32) {
    %c0_i32 = arith.constant 0 : i32
    %c0_i32_0 = arith.constant 0 : i32
    %c0_i32_1 = arith.constant 0 : i32
    return %c0_i32, %c0_i32_0 : i32, i32
  }
  func.func @transform_2(%arg0: i32) -> (i32, i32) {
    %c0_i32 = arith.constant 0 : i32
    %c0_i32_0 = arith.constant 0 : i32
    %c0_i32_1 = arith.constant 0 : i32
    return %c0_i32, %c0_i32_0 : i32, i32
  }
  func.func @transform_3(%arg0: i32) -> (i32, i32) {
    %c0_i32 = arith.constant 0 : i32
    %c0_i32_0 = arith.constant 0 : i32
    %c0_i32_1 = arith.constant 0 : i32
    return %c0_i32, %c0_i32_0 : i32, i32
  }
  func.func @transform_4(%arg0: i32) -> (i32, i32) {
    %c0_i32 = arith.constant 0 : i32
    %c0_i32_0 = arith.constant 0 : i32
    %c0_i32_1 = arith.constant 0 : i32
    return %c0_i32, %c0_i32_0 : i32, i32
  }
  func.func @transform_5(%arg0: i32) -> (i32, i32) {
    %c0_i32 = arith.constant 0 : i32
    %c0_i32_0 = arith.constant 0 : i32
    %c0_i32_1 = arith.constant 0 : i32
    return %c0_i32, %c0_i32_0 : i32, i32
  }
  func.func @transform_6(%arg0: i32) -> (i32, i32) {
    %c0_i32 = arith.constant 0 : i32
    %c0_i32_0 = arith.constant 0 : i32
    %c0_i32_1 = arith.constant 0 : i32
    return %c0_i32, %c0_i32_0 : i32, i32
  }
  func.func @transform_7(%arg0: i32) -> (i32, i32) {
    %c0_i32 = arith.constant 0 : i32
    %c0_i32_0 = arith.constant 0 : i32
    return %arg0, %c0_i32 : i32, i32
  }
}

</mosaic_0001>

<llo_original>
// kernel: tpu_custom_call.1
$region0: #{tpu_custom_call.1}
  #allocation0 [shape = 'u32[]', space=smem, size = 0x4, offset = 0x4, fixed_abs, tag = 'smem constant byte address 0x4 - core index']
  #allocation1 [shape = 'u32[144,128]{1,0:T(1,128)}', space=vmem, size = 0x12000, scoped, tag = 'internal scratch']
  %s0 = inlined_call_operand.hbm [shape: f32[512,128], index: 0, kind: input, shape index: {}]
  %s1 = inlined_call_operand.vmem [shape: f32[1,128], index: 1, kind: input, shape index: {}]
  %s2 = inlined_call_operand.vmem [shape: f32[1,128], index: 2, kind: input, shape index: {}]
  %s3 = inlined_call_operand.hbm [shape: bf16[128,256], index: 3, kind: input, shape index: {}]
  %s4 = inlined_call_operand.vmem [shape: f32[1,256], index: 4, kind: input, shape index: {}]
  %s5 = inlined_call_operand.hbm [shape: bf16[384,256], index: 5, kind: input, shape index: {}]
  %s6 = inlined_call_operand.vmem [shape: f32[1,256], index: 6, kind: input, shape index: {}]
  %s7 = inlined_call_operand.hbm [shape: f32[512,256], index: 7, kind: output, shape index: {}]
  %s8 = sld [smem:[#allocation0]]
  $region73: #{tpu_custom_call.1} parent=0
    _
  %s10 = ssub.s32 1, %s8
  %s11 = scalar_select 0, %s10, %s8
  $region1: #{tpu_custom_call.1} parent=0
    #allocation2 [shape = 'u8[262144]{0}', space=vmem, size = 0x40000, scoped, tag = 'input window, operand 0']
    #allocation3 [shape = 's32[2]{0}', space=sflag, size = 0x8, scoped, tag = 'scoped memory for tpu_custom_call.1']
    #allocation4 [shape = 's32[2]{0}', space=sflag, size = 0x8, scoped, tag = 'scoped memory for tpu_custom_call.1']
    #allocation5 [shape = 'u8[65536]{0}', space=vmem, size = 0x10000, scoped, tag = 'input window, operand 3, single buffered']
    #allocation6 [shape = 's32[1]{0}', space=sflag, size = 0x4, scoped, tag = 'scoped memory for tpu_custom_call.1']
    #allocation7 [shape = 'u8[196608]{0}', space=vmem, size = 0x30000, scoped, tag = 'input window, operand 5, single buffered']
    #allocation8 [shape = 'u8[524288]{0}', space=vmem, size = 0x80000, scoped, tag = 'output window, operand 0']
    %12 = vsyncpa [#allocation3], 0
    %s13 = scalar_lea.sflag [#allocation3], 1
    %14 = vsyncpa %s13, 0
    %15 = vsyncpa [#allocation6], 0
    %16 = vsyncpa [#allocation4], 0
    %s17 = scalar_lea.sflag [#allocation4], 1
    %18 = vsyncpa %s17, 0
    loop: start=0, step=1, limit=4
    $region2: #{tpu_custom_call.1} parent=1 // loop_pre_header
      _
    $region3: #{tpu_custom_call.1} parent=1 // loop_header
      %s20 = sphi 0, %s24
      %p21 = scmp.ge.s32.totalorder %s20, 4
      %s30 = sphi 0, %s32
      %s33 = sphi 0, %s30
      %s34 = sphi 0, %s33
      %s50 = sphi 0, %s34
      %s54 = sphi 0, %s54
      %s56 = sphi 0, %s54
      %s57 = sphi 0, %s56
      %s71 = sphi 0, %s57
      %s75 = sphi 0, %s75
      %s77 = sphi 0, %s75
      %s78 = sphi 0, %s77
      %s92 = sphi 0, %s78
      %s96 = sphi 0, %s96
      %s98 = sphi 0, %s96
      %s99 = sphi 0, %s98
      %s113 = sphi 0, %s99
      %s117 = sphi 0, %s117
      %s119 = sphi 0, %s117
      %s120 = sphi 0, %s119
      %s134 = sphi 0, %s120
      %s138 = sphi 0, %s138
      %s140 = sphi 0, %s138
      %s141 = sphi 0, %s140
      %s155 = sphi 0, %s141
      %s159 = sphi 0, %s159
      %s161 = sphi 0, %s159
      %s162 = sphi 0, %s161
      %s176 = sphi 0, %s162
      %s182 = sphi 0, %s184
      %s185 = sphi 0, %s182
      %s186 = sphi 0, %s185
      %s202 = sphi 0, %s186
    $region4: #{tpu_custom_call.1} parent=1 // loop_header_branch
      %23 = sbr.rel (%p21) target = $region8
    $region5: #{tpu_custom_call.1} parent=1 // loop_body
      %s25 = ssub.s32 %s20, 1
      %s26 = ssub.s32 %s20, 2
      %s27 = sadd.s32 %s20, 1
      %s28 = ssub.s32 %s20, %s27
      %p29 = scmp.eq.s32.totalorder %s28, 0
      %s31 = sadd.s32 %s30, 1
      %s32 = scalar_select %p29, %s30, %s31
      %p35 = pneg %p29
      %p36 = scmp.eq.s32.totalorder %s20, 1
      %p37 = por %p35, %p36
      %p38 = scmp.ne.s32.totalorder %s30, %s33
      %p39 = scmp.eq.s32.totalorder %s20, 0
      %p40 = por %p38, %p39
      %p41 = scmp.ne.s32.totalorder %s30, %s33
      %p42 = scmp.eq.s32.totalorder %s25, 1
      %p43 = por %p41, %p42
      %p44 = scmp.ne.s32.totalorder %s33, %s34
      %p45 = scmp.eq.s32.totalorder %s25, 0
      %p46 = por %p44, %p45
      %p47 = scmp.ne.s32.totalorder %s33, %s34
      %p48 = scmp.eq.s32.totalorder %s26, 1
      %p49 = por %p47, %p48
      %p51 = scmp.ne.s32.totalorder %s34, %s50
      %p52 = scmp.eq.s32.totalorder %s26, 0
      %p53 = por %p51, %p52
      %s55 = sadd.s32 %s54, 1
      %p58 = scmp.eq.s32.totalorder %s20, 1
      %p59 = scmp.ne.s32.totalorder %s54, %s56
      %p60 = scmp.eq.s32.totalorder %s20, 0
      %p61 = por %p59, %p60
      %p62 = scmp.ne.s32.totalorder %s54, %s56
      %p63 = scmp.eq.s32.totalorder %s25, 1
      %p64 = por %p62, %p63
      %p65 = scmp.ne.s32.totalorder %s56, %s57
      %p66 = scmp.eq.s32.totalorder %s25, 0
      %p67 = por %p65, %p66
      %p68 = scmp.ne.s32.totalorder %s56, %s57
      %p69 = scmp.eq.s32.totalorder %s26, 1
      %p70 = por %p68, %p69
      %p72 = scmp.ne.s32.totalorder %s57, %s71
      %p73 = scmp.eq.s32.totalorder %s26, 0
      %p74 = por %p72, %p73
      %s76 = sadd.s32 %s75, 1
      %p79 = scmp.eq.s32.totalorder %s20, 1
      %p80 = scmp.ne.s32.totalorder %s75, %s77
      %p81 = scmp.eq.s32.totalorder %s20, 0
      %p82 = por %p80, %p81
      %p83 = scmp.ne.s32.totalorder %s75, %s77
      %p84 = scmp.eq.s32.totalorder %s25, 1
      %p85 = por %p83, %p84
      %p86 = scmp.ne.s32.totalorder %s77, %s78
      %p87 = scmp.eq.s32.totalorder %s25, 0
      %p88 = por %p86, %p87
      %p89 = scmp.ne.s32.totalorder %s77, %s78
      %p90 = scmp.eq.s32.totalorder %s26, 1
      %p91 = por %p89, %p90
      %p93 = scmp.ne.s32.totalorder %s78, %s92
      %p94 = scmp.eq.s32.totalorder %s26, 0
      %p95 = por %p93, %p94
      %s97 = sadd.s32 %s96, 1
      %p100 = scmp.eq.s32.totalorder %s20, 1
      %p101 = scmp.ne.s32.totalorder %s96, %s98
      %p102 = scmp.eq.s32.totalorder %s20, 0
      %p103 = por %p101, %p102
      %p104 = scmp.ne.s32.totalorder %s96, %s98
      %p105 = scmp.eq.s32.totalorder %s25, 1
      %p106 = por %p104, %p105
      %p107 = scmp.ne.s32.totalorder %s98, %s99
      %p108 = scmp.eq.s32.totalorder %s25, 0
      %p109 = por %p107, %p108
      %p110 = scmp.ne.s32.totalorder %s98, %s99
      %p111 = scmp.eq.s32.totalorder %s26, 1
      %p112 = por %p110, %p111
      %p114 = scmp.ne.s32.totalorder %s99, %s113
      %p115 = scmp.eq.s32.totalorder %s26, 0
      %p116 = por %p114, %p115
      %s118 = sadd.s32 %s117, 1
      %p121 = scmp.eq.s32.totalorder %s20, 1
      %p122 = scmp.ne.s32.totalorder %s117, %s119
      %p123 = scmp.eq.s32.totalorder %s20, 0
      %p124 = por %p122, %p123
      %p125 = scmp.ne.s32.totalorder %s117, %s119
      %p126 = scmp.eq.s32.totalorder %s25, 1
      %p127 = por %p125, %p126
      %p128 = scmp.ne.s32.totalorder %s119, %s120
      %p129 = scmp.eq.s32.totalorder %s25, 0
      %p130 = por %p128, %p129
      %p131 = scmp.ne.s32.totalorder %s119, %s120
      %p132 = scmp.eq.s32.totalorder %s26, 1
      %p133 = por %p131, %p132
      %p135 = scmp.ne.s32.totalorder %s120, %s134
      %p136 = scmp.eq.s32.totalorder %s26, 0
      %p137 = por %p135, %p136
      %s139 = sadd.s32 %s138, 1
      %p142 = scmp.eq.s32.totalorder %s20, 1
      %p143 = scmp.ne.s32.totalorder %s138, %s140
      %p144 = scmp.eq.s32.totalorder %s20, 0
      %p145 = por %p143, %p144
      %p146 = scmp.ne.s32.totalorder %s138, %s140
      %p147 = scmp.eq.s32.totalorder %s25, 1
      %p148 = por %p146, %p147
      %p149 = scmp.ne.s32.totalorder %s140, %s141
      %p150 = scmp.eq.s32.totalorder %s25, 0
      %p151 = por %p149, %p150
      %p152 = scmp.ne.s32.totalorder %s140, %s141
      %p153 = scmp.eq.s32.totalorder %s26, 1
      %p154 = por %p152, %p153
      %p156 = scmp.ne.s32.totalorder %s141, %s155
      %p157 = scmp.eq.s32.totalorder %s26, 0
      %p158 = por %p156, %p157
      %s160 = sadd.s32 %s159, 1
      %p163 = scmp.eq.s32.totalorder %s20, 1
      %p164 = scmp.ne.s32.totalorder %s159, %s161
      %p165 = scmp.eq.s32.totalorder %s20, 0
      %p166 = por %p164, %p165
      %p167 = scmp.ne.s32.totalorder %s159, %s161
      %p168 = scmp.eq.s32.totalorder %s25, 1
      %p169 = por %p167, %p168
      %p170 = scmp.ne.s32.totalorder %s161, %s162
      %p171 = scmp.eq.s32.totalorder %s25, 0
      %p172 = por %p170, %p171
      %p173 = scmp.ne.s32.totalorder %s161, %s162
      %p174 = scmp.eq.s32.totalorder %s26, 1
      %p175 = por %p173, %p174
      %p177 = scmp.ne.s32.totalorder %s162, %s176
      %p178 = scmp.eq.s32.totalorder %s26, 0
      %p179 = por %p177, %p178
      %s180 = ssub.s32 %s20, %s27
      %p181 = scmp.eq.s32.totalorder %s180, 0
      %s183 = sadd.s32 %s182, 1
      %s184 = scalar_select %p181, %s182, %s183
      %p187 = pneg %p181
      %p188 = scmp.eq.s32.totalorder %s20, 1
      %p189 = por %p187, %p188
      %p190 = scmp.ne.s32.totalorder %s182, %s185
      %p191 = scmp.eq.s32.totalorder %s20, 0
      %p192 = por %p190, %p191
      %p193 = scmp.ne.s32.totalorder %s182, %s185
      %p194 = scmp.eq.s32.totalorder %s25, 1
      %p195 = por %p193, %p194
      %p196 = scmp.ne.s32.totalorder %s185, %s186
      %p197 = scmp.eq.s32.totalorder %s25, 0
      %p198 = por %p196, %p197
      %p199 = scmp.ne.s32.totalorder %s185, %s186
      %p200 = scmp.eq.s32.totalorder %s26, 1
      %p201 = por %p199, %p200
      %p203 = scmp.ne.s32.totalorder %s186, %s202
      %p204 = scmp.eq.s32.totalorder %s26, 0
      %p205 = por %p203, %p204
      %p206 = scmp.le.s32.totalorder 1, %s20
      %p207 = scmp.lt.s32.totalorder %s20, 3
      %p208 = pnand %p206, %p207
      %p209 = pneg %p208
      // Predicated region
      $region9: #{tpu_custom_call.1} parent=5 // pred_check
        _
      $region10: #{tpu_custom_call.1} parent=5 // pred_check_branch
        %211 = sbr.rel (%p208) target = $region12
      $region11: #{tpu_custom_call.1} parent=5 // pred_region
        %s212 = ssub.s32 %s20, 1
        // Predicated region
        $region13: #{tpu_custom_call.1} parent=11 // pred_check
          %p213 = pneg %p67
        $region14: #{tpu_custom_call.1} parent=11 // pred_check_branch
          %215 = sbr.rel (%p213) target = $region16
        $region15: #{tpu_custom_call.1} parent=11 // pred_region
          _
        $region16: #{tpu_custom_call.1} parent=11 // pred_fallthru
          _
        // Predicated region
        $region17: #{tpu_custom_call.1} parent=11 // pred_check
          %p216 = pneg %p88
        $region18: #{tpu_custom_call.1} parent=11 // pred_check_branch
          %218 = sbr.rel (%p216) target = $region20
        $region19: #{tpu_custom_call.1} parent=11 // pred_region
          _
        $region20: #{tpu_custom_call.1} parent=11 // pred_fallthru
          _
        // Predicated region
        $region21: #{tpu_custom_call.1} parent=11 // pred_check
          %p219 = pneg %p109
        $region22: #{tpu_custom_call.1} parent=11 // pred_check_branch
          %221 = sbr.rel (%p219) target = $region24
        $region23: #{tpu_custom_call.1} parent=11 // pred_region
          %s223 = ssub.s32 2048, 2048
          %224 = vsyncadd [#allocation6], %s223
          %s225 = sshll.u32 [#allocation5], 4
          %s226 = int_to_ptr.vmem [resolvable:$true] %s225
          %231 = dma.hbm_to_vmem [thread:$0]  %s3, 2048, %s226, [#allocation6], 128, 128, 8
        $region24: #{tpu_custom_call.1} parent=11 // pred_fallthru
          _
        // Predicated region
        $region25: #{tpu_custom_call.1} parent=11 // pred_check
          %p232 = pneg %p130
        $region26: #{tpu_custom_call.1} parent=11 // pred_check_branch
          %234 = sbr.rel (%p232) target = $region28
        $region27: #{tpu_custom_call.1} parent=11 // pred_region
          _
        $region28: #{tpu_custom_call.1} parent=11 // pred_fallthru
          _
        // Predicated region
        $region29: #{tpu_custom_call.1} parent=11 // pred_check
          %p235 = pneg %p151
        $region30: #{tpu_custom_call.1} parent=11 // pred_check_branch
          %237 = sbr.rel (%p235) target = $region32
        $region31: #{tpu_custom_call.1} parent=11 // pred_region
          %s239 = ssub.s32 6144, 6144
          %240 = vsyncadd [#allocation6], %s239
          %s241 = sshll.u32 [#allocation7], 4
          %s242 = int_to_ptr.vmem [resolvable:$true] %s241
          %247 = dma.hbm_to_vmem [thread:$0]  %s5, 6144, %s242, [#allocation6], 128, 128, 8
        $region32: #{tpu_custom_call.1} parent=11 // pred_fallthru
          _
        // Predicated region
        $region33: #{tpu_custom_call.1} parent=11 // pred_check
          %p248 = pneg %p172
        $region34: #{tpu_custom_call.1} parent=11 // pred_check_branch
          %250 = sbr.rel (%p248) target = $region36
        $region35: #{tpu_custom_call.1} parent=11 // pred_region
          _
        $region36: #{tpu_custom_call.1} parent=11 // pred_fallthru
          _
      $region12: #{tpu_custom_call.1} parent=5 // pred_fallthru
        _
      %p251 = scmp.lt.s32.totalorder %s20, 2
      // Predicated region
      $region37: #{tpu_custom_call.1} parent=5 // pred_check
        %p252 = pneg %p251
      $region38: #{tpu_custom_call.1} parent=5 // pred_check_branch
        %254 = sbr.rel (%p252) target = $region40
      $region39: #{tpu_custom_call.1} parent=5 // pred_region
        // Predicated region
        $region41: #{tpu_custom_call.1} parent=39 // pred_check
          %p255 = pneg %p40
        $region42: #{tpu_custom_call.1} parent=39 // pred_check_branch
          %257 = sbr.rel (%p255) target = $region44
        $region43: #{tpu_custom_call.1} parent=39 // pred_region
          %s258 = sand.u32 %s30, 1
          %s259 = scalar_lea.sflag [#allocation3], %s258
          %s260 = sand.u32 %s30, 1
          %s261 = smul.addr %s260, 256
          %s262 = scalar_lea.vmem [#allocation2], %s261
          %s263 = smul.u32 32, %s20
          %s265 = ssub.s32 4096, 4096
          %266 = vsyncadd %s259, %s265
          %s267 = smul.addr %s263, 128
          %s268 = scalar_lea.hbm %s0, %s267
          %s269 = sshll.u32 %s262, 4
          %s270 = int_to_ptr.vmem [resolvable:$true] %s269
          %275 = dma.hbm_to_vmem [thread:$0]  %s268, 4096, %s270, %s259, 128, 128, 8
        $region44: #{tpu_custom_call.1} parent=39 // pred_fallthru
          _
      $region40: #{tpu_custom_call.1} parent=5 // pred_fallthru
        _
      %p276 = scmp.le.s32.totalorder 1, %s20
      %p277 = scmp.lt.s32.totalorder %s20, 3
      %p278 = pnand %p276, %p277
      %p279 = pneg %p278
      // Predicated region
      $region45: #{tpu_custom_call.1} parent=5 // pred_check
        _
      $region46: #{tpu_custom_call.1} parent=5 // pred_check_branch
        %281 = sbr.rel (%p278) target = $region48
      $region47: #{tpu_custom_call.1} parent=5 // pred_region
        %s282 = ssub.s32 %s20, 1
        %s283 = sand.u32 %s33, 1
        %s284 = scalar_lea.sflag [#allocation3], %s283
        %s285 = sand.u32 %s33, 1
        %s286 = smul.addr %s285, 256
        %s287 = scalar_lea.vmem [#allocation2], %s286
        // Predicated region
        $region49: #{tpu_custom_call.1} parent=47 // pred_check
          %p288 = pneg %p46
        $region50: #{tpu_custom_call.1} parent=47 // pred_check_branch
          %290 = sbr.rel (%p288) target = $region52
        $region51: #{tpu_custom_call.1} parent=47 // pred_region
          %291 = dma.done %s284, 4096
        $region52: #{tpu_custom_call.1} parent=47 // pred_fallthru
          _
        // Predicated region
        $region53: #{tpu_custom_call.1} parent=47 // pred_check
          %p292 = pneg %p109
        $region54: #{tpu_custom_call.1} parent=47 // pred_check_branch
          %294 = sbr.rel (%p292) target = $region56
        $region55: #{tpu_custom_call.1} parent=47 // pred_region
          %295 = dma.done [#allocation6], 2048
        $region56: #{tpu_custom_call.1} parent=47 // pred_fallthru
          _
        // Predicated region
        $region57: #{tpu_custom_call.1} parent=47 // pred_check
          %p296 = pneg %p151
        $region58: #{tpu_custom_call.1} parent=47 // pred_check_branch
          %298 = sbr.rel (%p296) target = $region60
        $region59: #{tpu_custom_call.1} parent=47 // pred_region
          %299 = dma.done [#allocation6], 6144
        $region60: #{tpu_custom_call.1} parent=47 // pred_fallthru
          _
        %s300 = sand.u32 %s33, 1
        %s301 = scalar_lea.sflag [#allocation3], %s300
        %s302 = sand.u32 %s33, 1
        %s303 = smul.addr %s302, 256
        %s304 = scalar_lea.vmem [#allocation2], %s303
        %p305 = pneg %p46
        %p306 = pneg %p43
        %p307 = pneg %p67
        %p308 = pneg %p64
        %p309 = pneg %p88
        %p310 = pneg %p85
        %p311 = pneg %p109
        %p312 = pneg %p106
        %p313 = pneg %p130
        %p314 = pneg %p127
        %p315 = pneg %p151
        %p316 = pneg %p148
        %p317 = pneg %p172
        %p318 = pneg %p169
        %p319 = pneg %p198
        %p320 = pneg %p195
        %s321 = sand.u32 %s185, 1
        %s322 = scalar_lea.sflag [#allocation4], %s321
        %s323 = sand.u32 %s185, 1
        %s324 = smul.addr %s323, 512
        %s325 = scalar_lea.vmem [#allocation8], %s324
        %s326 = smul.u32 32, %s25
        %s327 = smul.u32 32, %s25
        %v329 = vld [vmem:[%s287] sm:$0xff]
        %v330 = vld [vmem:[%s287 + $0x8] sm:$0xff]
        %v331 = vld [vmem:[%s287 + $0x10] sm:$0xff]
        %v332 = vld [vmem:[%s287 + $0x18] sm:$0xff]
        %v333 = vld [vmem:[%s287 + $0x20] sm:$0xff]
        %v334 = vld [vmem:[%s287 + $0x28] sm:$0xff]
        %v335 = vld [vmem:[%s287 + $0x30] sm:$0xff]
        %v336 = vld [vmem:[%s287 + $0x38] sm:$0xff]
        %v337 = vld [vmem:[%s287 + $0x40] sm:$0xff]
        %v338 = vld [vmem:[%s287 + $0x48] sm:$0xff]
        %v339 = vld [vmem:[%s287 + $0x50] sm:$0xff]
        %v340 = vld [vmem:[%s287 + $0x58] sm:$0xff]
        %v341 = vld [vmem:[%s287 + $0x60] sm:$0xff]
        %v342 = vld [vmem:[%s287 + $0x68] sm:$0xff]
        %v343 = vld [vmem:[%s287 + $0x70] sm:$0xff]
        %v344 = vld [vmem:[%s287 + $0x78] sm:$0xff]
        %v345 = vld [vmem:[%s287 + $0x80] sm:$0xff]
        %v346 = vld [vmem:[%s287 + $0x88] sm:$0xff]
        %v347 = vld [vmem:[%s287 + $0x90] sm:$0xff]
        %v348 = vld [vmem:[%s287 + $0x98] sm:$0xff]
        %v349 = vld [vmem:[%s287 + $0xa0] sm:$0xff]
        %v350 = vld [vmem:[%s287 + $0xa8] sm:$0xff]
        %v351 = vld [vmem:[%s287 + $0xb0] sm:$0xff]
        %v352 = vld [vmem:[%s287 + $0xb8] sm:$0xff]
        %v353 = vld [vmem:[%s287 + $0xc0] sm:$0xff]
        %v354 = vld [vmem:[%s287 + $0xc8] sm:$0xff]
        %v355 = vld [vmem:[%s287 + $0xd0] sm:$0xff]
        %v356 = vld [vmem:[%s287 + $0xd8] sm:$0xff]
        %v357 = vld [vmem:[%s287 + $0xe0] sm:$0xff]
        %v358 = vld [vmem:[%s287 + $0xe8] sm:$0xff]
        %v359 = vld [vmem:[%s287 + $0xf0] sm:$0xff]
        %v360 = vld [vmem:[%s287 + $0xf8] sm:$0xff]
        %v361 = vld [vmem:[%s1] sm:$0x1]
        %v363 = vlaneseq
        %v364 = vshrl.u32 %v363, 7
        %v365 = vsub.s32 0, %v364
        %v366 = vrot.slane %v361, %v365
        %v368 = vmul.f32 %v329, %v366
        %v369 = vmul.f32 %v330, %v366
        %v370 = vmul.f32 %v331, %v366
        %v371 = vmul.f32 %v332, %v366
        %v372 = vmul.f32 %v333, %v366
        %v373 = vmul.f32 %v334, %v366
        %v374 = vmul.f32 %v335, %v366
        %v375 = vmul.f32 %v336, %v366
        %v376 = vmul.f32 %v337, %v366
        %v377 = vmul.f32 %v338, %v366
        %v378 = vmul.f32 %v339, %v366
        %v379 = vmul.f32 %v340, %v366
        %v380 = vmul.f32 %v341, %v366
        %v381 = vmul.f32 %v342, %v366
        %v382 = vmul.f32 %v343, %v366
        %v383 = vmul.f32 %v344, %v366
        %v384 = vmul.f32 %v345, %v366
        %v385 = vmul.f32 %v346, %v366
        %v386 = vmul.f32 %v347, %v366
        %v387 = vmul.f32 %v348, %v366
        %v388 = vmul.f32 %v349, %v366
        %v389 = vmul.f32 %v350, %v366
        %v390 = vmul.f32 %v351, %v366
        %v391 = vmul.f32 %v352, %v366
        %v392 = vmul.f32 %v353, %v366
        %v393 = vmul.f32 %v354, %v366
        %v394 = vmul.f32 %v355, %v366
        %v395 = vmul.f32 %v356, %v366
        %v396 = vmul.f32 %v357, %v366
        %v397 = vmul.f32 %v358, %v366
        %v398 = vmul.f32 %v359, %v366
        %v399 = vmul.f32 %v360, %v366
        %v400 = vld [vmem:[%s2] sm:$0x1]
        %v402 = vlaneseq
        %v403 = vshrl.u32 %v402, 7
        %v404 = vsub.s32 0, %v403
        %v405 = vrot.slane %v400, %v404
        %v407 = vadd.f32 %v368, %v405
        %v408 = vadd.f32 %v369, %v405
        %v409 = vadd.f32 %v370, %v405
        %v410 = vadd.f32 %v371, %v405
        %v411 = vadd.f32 %v372, %v405
        %v412 = vadd.f32 %v373, %v405
        %v413 = vadd.f32 %v374, %v405
        %v414 = vadd.f32 %v375, %v405
        %v415 = vadd.f32 %v376, %v405
        %v416 = vadd.f32 %v377, %v405
        %v417 = vadd.f32 %v378, %v405
        %v418 = vadd.f32 %v379, %v405
        %v419 = vadd.f32 %v380, %v405
        %v420 = vadd.f32 %v381, %v405
        %v421 = vadd.f32 %v382, %v405
        %v422 = vadd.f32 %v383, %v405
        %v423 = vadd.f32 %v384, %v405
        %v424 = vadd.f32 %v385, %v405
        %v425 = vadd.f32 %v386, %v405
        %v426 = vadd.f32 %v387, %v405
        %v427 = vadd.f32 %v388, %v405
        %v428 = vadd.f32 %v389, %v405
        %v429 = vadd.f32 %v390, %v405
        %v430 = vadd.f32 %v391, %v405
        %v431 = vadd.f32 %v392, %v405
        %v432 = vadd.f32 %v393, %v405
        %v433 = vadd.f32 %v394, %v405
        %v434 = vadd.f32 %v395, %v405
        %v435 = vadd.f32 %v396, %v405
        %v436 = vadd.f32 %v397, %v405
        %v437 = vadd.f32 %v398, %v405
        %v438 = vadd.f32 %v399, %v405
        %v439 = vxor.u32 %v407, 2147483648
        %v440 = vxor.u32 %v408, 2147483648
        %v441 = vxor.u32 %v409, 2147483648
        %v442 = vxor.u32 %v410, 2147483648
        %v443 = vxor.u32 %v411, 2147483648
        %v444 = vxor.u32 %v412, 2147483648
        %v445 = vxor.u32 %v413, 2147483648
        %v446 = vxor.u32 %v414, 2147483648
        %v447 = vxor.u32 %v415, 2147483648
        %v448 = vxor.u32 %v416, 2147483648
        %v449 = vxor.u32 %v417, 2147483648
        %v450 = vxor.u32 %v418, 2147483648
        %v451 = vxor.u32 %v419, 2147483648
        %v452 = vxor.u32 %v420, 2147483648
        %v453 = vxor.u32 %v421, 2147483648
        %v454 = vxor.u32 %v422, 2147483648
        %v455 = vxor.u32 %v423, 2147483648
        %v456 = vxor.u32 %v424, 2147483648
        %v457 = vxor.u32 %v425, 2147483648
        %v458 = vxor.u32 %v426, 2147483648
        %v459 = vxor.u32 %v427, 2147483648
        %v460 = vxor.u32 %v428, 2147483648
        %v461 = vxor.u32 %v429, 2147483648
        %v462 = vxor.u32 %v430, 2147483648
        %v463 = vxor.u32 %v431, 2147483648
        %v464 = vxor.u32 %v432, 2147483648
        %v465 = vxor.u32 %v433, 2147483648
        %v466 = vxor.u32 %v434, 2147483648
        %v467 = vxor.u32 %v435, 2147483648
        %v468 = vxor.u32 %v436, 2147483648
        %v469 = vxor.u32 %v437, 2147483648
        %v470 = vxor.u32 %v438, 2147483648
        %v471 = vmul.f32 %v439, 1.442695
        %v472 = vpow.pop %v471
        %v473 = vmul.f32 %v440, 1.442695
        %v474 = vpow.pop %v473
        %v475 = vmul.f32 %v441, 1.442695
        %v476 = vpow.pop %v475
        %v477 = vmul.f32 %v442, 1.442695
        %v478 = vpow.pop %v477
        %v479 = vmul.f32 %v443, 1.442695
        %v480 = vpow.pop %v479
        %v481 = vmul.f32 %v444, 1.442695
        %v482 = vpow.pop %v481
        %v483 = vmul.f32 %v445, 1.442695
        %v484 = vpow.pop %v483
        %v485 = vmul.f32 %v446, 1.442695
        %v486 = vpow.pop %v485
        %v487 = vmul.f32 %v447, 1.442695
        %v488 = vpow.pop %v487
        %v489 = vmul.f32 %v448, 1.442695
        %v490 = vpow.pop %v489
        %v491 = vmul.f32 %v449, 1.442695
        %v492 = vpow.pop %v491
        %v493 = vmul.f32 %v450, 1.442695
        %v494 = vpow.pop %v493
        %v495 = vmul.f32 %v451, 1.442695
        %v496 = vpow.pop %v495
        %v497 = vmul.f32 %v452, 1.442695
        %v498 = vpow.pop %v497
        %v499 = vmul.f32 %v453, 1.442695
        %v500 = vpow.pop %v499
        %v501 = vmul.f32 %v454, 1.442695
        %v502 = vpow.pop %v501
        %v503 = vmul.f32 %v455, 1.442695
        %v504 = vpow.pop %v503
        %v505 = vmul.f32 %v456, 1.442695
        %v506 = vpow.pop %v505
        %v507 = vmul.f32 %v457, 1.442695
        %v508 = vpow.pop %v507
        %v509 = vmul.f32 %v458, 1.442695
        %v510 = vpow.pop %v509
        %v511 = vmul.f32 %v459, 1.442695
        %v512 = vpow.pop %v511
        %v513 = vmul.f32 %v460, 1.442695
        %v514 = vpow.pop %v513
        %v515 = vmul.f32 %v461, 1.442695
        %v516 = vpow.pop %v515
        %v517 = vmul.f32 %v462, 1.442695
        %v518 = vpow.pop %v517
        %v519 = vmul.f32 %v463, 1.442695
        %v520 = vpow.pop %v519
        %v521 = vmul.f32 %v464, 1.442695
        %v522 = vpow.pop %v521
        %v523 = vmul.f32 %v465, 1.442695
        %v524 = vpow.pop %v523
        %v525 = vmul.f32 %v466, 1.442695
        %v526 = vpow.pop %v525
        %v527 = vmul.f32 %v467, 1.442695
        %v528 = vpow.pop %v527
        %v529 = vmul.f32 %v468, 1.442695
        %v530 = vpow.pop %v529
        %v531 = vmul.f32 %v469, 1.442695
        %v532 = vpow.pop %v531
        %v533 = vmul.f32 %v470, 1.442695
        %v534 = vpow.pop %v533
        %v535 = vadd.f32 %v472, 1.0
        %v536 = vadd.f32 %v474, 1.0
        %v537 = vadd.f32 %v476, 1.0
        %v538 = vadd.f32 %v478, 1.0
        %v539 = vadd.f32 %v480, 1.0
        %v540 = vadd.f32 %v482, 1.0
        %v541 = vadd.f32 %v484, 1.0
        %v542 = vadd.f32 %v486, 1.0
        %v543 = vadd.f32 %v488, 1.0
        %v544 = vadd.f32 %v490, 1.0
        %v545 = vadd.f32 %v492, 1.0
        %v546 = vadd.f32 %v494, 1.0
        %v547 = vadd.f32 %v496, 1.0
        %v548 = vadd.f32 %v498, 1.0
        %v549 = vadd.f32 %v500, 1.0
        %v550 = vadd.f32 %v502, 1.0
        %v551 = vadd.f32 %v504, 1.0
        %v552 = vadd.f32 %v506, 1.0
        %v553 = vadd.f32 %v508, 1.0
        %v554 = vadd.f32 %v510, 1.0
        %v555 = vadd.f32 %v512, 1.0
        %v556 = vadd.f32 %v514, 1.0
        %v557 = vadd.f32 %v516, 1.0
        %v558 = vadd.f32 %v518, 1.0
        %v559 = vadd.f32 %v520, 1.0
        %v560 = vadd.f32 %v522, 1.0
        %v561 = vadd.f32 %v524, 1.0
        %v562 = vadd.f32 %v526, 1.0
        %v563 = vadd.f32 %v528, 1.0
        %v564 = vadd.f32 %v530, 1.0
        %v565 = vadd.f32 %v532, 1.0
        %v566 = vadd.f32 %v534, 1.0
        %v567 = vrcp.pop %v535
        %v568 = vmul.f32 1.0, %v567
        %v569 = vrcp.pop %v536
        %v570 = vmul.f32 1.0, %v569
        %v571 = vrcp.pop %v537
        %v572 = vmul.f32 1.0, %v571
        %v573 = vrcp.pop %v538
        %v574 = vmul.f32 1.0, %v573
        %v575 = vrcp.pop %v539
        %v576 = vmul.f32 1.0, %v575
        %v577 = vrcp.pop %v540
        %v578 = vmul.f32 1.0, %v577
        %v579 = vrcp.pop %v541
        %v580 = vmul.f32 1.0, %v579
        %v581 = vrcp.pop %v542
        %v582 = vmul.f32 1.0, %v581
        %v583 = vrcp.pop %v543
        %v584 = vmul.f32 1.0, %v583
        %v585 = vrcp.pop %v544
        %v586 = vmul.f32 1.0, %v585
        %v587 = vrcp.pop %v545
        %v588 = vmul.f32 1.0, %v587
        %v589 = vrcp.pop %v546
        %v590 = vmul.f32 1.0, %v589
        %v591 = vrcp.pop %v547
        %v592 = vmul.f32 1.0, %v591
        %v593 = vrcp.pop %v548
        %v594 = vmul.f32 1.0, %v593
        %v595 = vrcp.pop %v549
        %v596 = vmul.f32 1.0, %v595
        %v597 = vrcp.pop %v550
        %v598 = vmul.f32 1.0, %v597
        %v599 = vrcp.pop %v551
        %v600 = vmul.f32 1.0, %v599
        %v601 = vrcp.pop %v552
        %v602 = vmul.f32 1.0, %v601
        %v603 = vrcp.pop %v553
        %v604 = vmul.f32 1.0, %v603
        %v605 = vrcp.pop %v554
        %v606 = vmul.f32 1.0, %v605
        %v607 = vrcp.pop %v555
        %v608 = vmul.f32 1.0, %v607
        %v609 = vrcp.pop %v556
        %v610 = vmul.f32 1.0, %v609
        %v611 = vrcp.pop %v557
        %v612 = vmul.f32 1.0, %v611
        %v613 = vrcp.pop %v558
        %v614 = vmul.f32 1.0, %v613
        %v615 = vrcp.pop %v559
        %v616 = vmul.f32 1.0, %v615
        %v617 = vrcp.pop %v560
        %v618 = vmul.f32 1.0, %v617
        %v619 = vrcp.pop %v561
        %v620 = vmul.f32 1.0, %v619
        %v621 = vrcp.pop %v562
        %v622 = vmul.f32 1.0, %v621
        %v623 = vrcp.pop %v563
        %v624 = vmul.f32 1.0, %v623
        %v625 = vrcp.pop %v564
        %v626 = vmul.f32 1.0, %v625
        %v627 = vrcp.pop %v565
        %v628 = vmul.f32 1.0, %v627
        %v629 = vrcp.pop %v566
        %v630 = vmul.f32 1.0, %v629
        %v631 = vmul.f32 %v407, %v568
        %v632 = vmul.f32 %v408, %v570
        %v633 = vmul.f32 %v409, %v572
        %v634 = vmul.f32 %v410, %v574
        %v635 = vmul.f32 %v411, %v576
        %v636 = vmul.f32 %v412, %v578
        %v637 = vmul.f32 %v413, %v580
        %v638 = vmul.f32 %v414, %v582
        %v639 = vmul.f32 %v415, %v584
        %v640 = vmul.f32 %v416, %v586
        %v641 = vmul.f32 %v417, %v588
        %v642 = vmul.f32 %v418, %v590
        %v643 = vmul.f32 %v419, %v592
        %v644 = vmul.f32 %v420, %v594
        %v645 = vmul.f32 %v421, %v596
        %v646 = vmul.f32 %v422, %v598
        %v647 = vmul.f32 %v423, %v600
        %v648 = vmul.f32 %v424, %v602
        %v649 = vmul.f32 %v425, %v604
        %v650 = vmul.f32 %v426, %v606
        %v651 = vmul.f32 %v427, %v608
        %v652 = vmul.f32 %v428, %v610
        %v653 = vmul.f32 %v429, %v612
        %v654 = vmul.f32 %v430, %v614
        %v655 = vmul.f32 %v431, %v616
        %v656 = vmul.f32 %v432, %v618
        %v657 = vmul.f32 %v433, %v620
        %v658 = vmul.f32 %v434, %v622
        %v659 = vmul.f32 %v435, %v624
        %v660 = vmul.f32 %v436, %v626
        %v661 = vmul.f32 %v437, %v628
        %v662 = vmul.f32 %v438, %v630
        %v663 = vpack.c.bf16 %v632, %v631
        %v664 = vpack.c.bf16 %v634, %v633
        %v665 = vpack.c.bf16 %v636, %v635
        %v666 = vpack.c.bf16 %v638, %v637
        %v667 = vpack.c.bf16 %v640, %v639
        %v668 = vpack.c.bf16 %v642, %v641
        %v669 = vpack.c.bf16 %v644, %v643
        %v670 = vpack.c.bf16 %v646, %v645
        %v671 = vpack.c.bf16 %v648, %v647
        %v672 = vpack.c.bf16 %v650, %v649
        %v673 = vpack.c.bf16 %v652, %v651
        %v674 = vpack.c.bf16 %v654, %v653
        %v675 = vpack.c.bf16 %v656, %v655
        %v676 = vpack.c.bf16 %v658, %v657
        %v677 = vpack.c.bf16 %v660, %v659
        %v678 = vpack.c.bf16 %v662, %v661
        %v679 = vld [vmem:[#allocation5] sm:$0xff]
        %v680 = vld [vmem:[#allocation5 + $0x8] sm:$0xff]
        %v681 = vld [vmem:[#allocation5 + $0x10] sm:$0xff]
        %v682 = vld [vmem:[#allocation5 + $0x18] sm:$0xff]
        %v683 = vld [vmem:[#allocation5 + $0x20] sm:$0xff]
        %v684 = vld [vmem:[#allocation5 + $0x28] sm:$0xff]
        %v685 = vld [vmem:[#allocation5 + $0x30] sm:$0xff]
        %v686 = vld [vmem:[#allocation5 + $0x38] sm:$0xff]
        %v687 = vld [vmem:[#allocation5 + $0x40] sm:$0xff]
        %v688 = vld [vmem:[#allocation5 + $0x48] sm:$0xff]
        %v689 = vld [vmem:[#allocation5 + $0x50] sm:$0xff]
        %v690 = vld [vmem:[#allocation5 + $0x58] sm:$0xff]
        %v691 = vld [vmem:[#allocation5 + $0x60] sm:$0xff]
        %v692 = vld [vmem:[#allocation5 + $0x68] sm:$0xff]
        %v693 = vld [vmem:[#allocation5 + $0x70] sm:$0xff]
        %v694 = vld [vmem:[#allocation5 + $0x78] sm:$0xff]
        %v695 = vld [vmem:[%s4] sm:$0x3]
        %v697 = vlaneseq
        %v698 = vshrl.u32 %v697, 7
        %v699 = vsub.s32 0, %v698
        %v700 = vrot.slane %v695, %v699
        %v701 = vlaneseq
        %v702 = vshrl.u32 %v701, 7
        %v703 = vsub.s32 1, %v702
        %v704 = vrot.slane %v695, %v703
        %v723 = vunpack.c.l.b16 %v679
        %v724 = vunpack.c.h.b16 %v679
        %v725 = vunpack.c.l.b16 %v680
        %v726 = vunpack.c.h.b16 %v680
        %v727 = vunpack.c.l.b16 %v681
        %v728 = vunpack.c.h.b16 %v681
        %v729 = vunpack.c.l.b16 %v682
        %v730 = vunpack.c.h.b16 %v682
        %v731 = vunpack.c.l.b16 %v683
        %v732 = vunpack.c.h.b16 %v683
        %v733 = vunpack.c.l.b16 %v684
        %v734 = vunpack.c.h.b16 %v684
        %v735 = vunpack.c.l.b16 %v685
        %v736 = vunpack.c.h.b16 %v685
        %v737 = vunpack.c.l.b16 %v686
        %v738 = vunpack.c.h.b16 %v686
        %v739 = vunpack.c.l.b16 %v687
        %v740 = vunpack.c.h.b16 %v687
        %v741 = vunpack.c.l.b16 %v688
        %v742 = vunpack.c.h.b16 %v688
        %v743 = vunpack.c.l.b16 %v689
        %v744 = vunpack.c.h.b16 %v689
        %v745 = vunpack.c.l.b16 %v690
        %v746 = vunpack.c.h.b16 %v690
        %v747 = vunpack.c.l.b16 %v691
        %v748 = vunpack.c.h.b16 %v691
        %v749 = vunpack.c.l.b16 %v692
        %v750 = vunpack.c.h.b16 %v692
        %v751 = vunpack.c.l.b16 %v693
        %v752 = vunpack.c.h.b16 %v693
        %v753 = vunpack.c.l.b16 %v694
        %v754 = vunpack.c.h.b16 %v694
        %v755 = vpack.c.b16 %v725, %v723
        %v756 = vpack.c.b16 %v726, %v724
        %v757 = vpack.c.b16 %v729, %v727
        %v758 = vpack.c.b16 %v730, %v728
        %v759 = vpack.c.b16 %v733, %v731
        %v760 = vpack.c.b16 %v734, %v732
        %v761 = vpack.c.b16 %v737, %v735
        %v762 = vpack.c.b16 %v738, %v736
        %v763 = vpack.c.b16 %v741, %v739
        %v764 = vpack.c.b16 %v742, %v740
        %v765 = vpack.c.b16 %v745, %v743
        %v766 = vpack.c.b16 %v746, %v744
        %v767 = vpack.c.b16 %v749, %v747
        %v768 = vpack.c.b16 %v750, %v748
        %v769 = vpack.c.b16 %v753, %v751
        %v770 = vpack.c.b16 %v754, %v752
        %787 = vmatprep.subr.bf16.mxu0 %v756
        %788 = vmatpush1.bf16.msra.mxu0 %v755
        %789 = vmatprep.subr.bf16.mxu0 %v758
        %790 = vmatpush1.bf16.msra.mxu0 %v757
        %791 = vmatprep.subr.bf16.mxu0 %v760
        %792 = vmatpush1.bf16.msra.mxu0 %v759
        %793 = vmatprep.subr.bf16.mxu0 %v762
        %794 = vmatpush1.bf16.msra.mxu0 %v761
        %795 = vmatprep.subr.bf16.mxu0 %v764
        %796 = vmatpush1.bf16.msra.mxu0 %v763
        %797 = vmatprep.subr.bf16.mxu0 %v766
        %798 = vmatpush1.bf16.msra.mxu0 %v765
        %799 = vmatprep.subr.bf16.mxu0 %v768
        %800 = vmatpush1.bf16.msra.mxu0 %v767
        %801 = vmatprep.subr.bf16.mxu0 %v770
        %802 = vmatpush1.bf16.msra.mxu0 %v769
        %803 = vmatprep.subr.bf16.mxu0 0
        %804 = vmatpush1.bf16.msra.mxu0 0
        %805 = vmatprep.subr.bf16.mxu0 0
        %806 = vmatpush1.bf16.msra.mxu0 0
        %807 = vmatprep.subr.bf16.mxu0 0
        %808 = vmatpush1.bf16.msra.mxu0 0
        %809 = vmatprep.subr.bf16.mxu0 0
        %810 = vmatpush1.bf16.msra.mxu0 0
        %811 = vmatprep.subr.bf16.mxu0 0
        %812 = vmatpush1.bf16.msra.mxu0 0
        %813 = vmatprep.subr.bf16.mxu0 0
        %814 = vmatpush1.bf16.msra.mxu0 0
        %815 = vmatprep.subr.bf16.mxu0 0
        %816 = vmatpush1.bf16.msra.mxu0 0
        %817 = vmatprep.subr.bf16.mxu0 0
        %818 = vmatpush1.bf16.msra.mxu0 0
        %819 = vmatprep.mubr.bf16.mxu0 0
        %820 = vmatmul.mubr.bf16.gmra.mrb[0].mxu0 %v663
        %v821 = vpop.f32.mrb[0].mxu0
        %v822 = vadd.f32 %v700, %v821
        %v823 = vpop.f32.mrb[0].mxu0
        %v824 = vadd.f32 %v704, %v823
        %v825 = vpop.f32.mrb[0].mxu0
        %v826 = vadd.f32 %v700, %v825
        %v827 = vpop.f32.mrb[0].mxu0
        %v828 = vadd.f32 %v704, %v827
        %829 = vmatprep.mubr.bf16.mxu0 0
        %830 = vmatmul.mubr.bf16.gmra.mrb[0].mxu0 %v664
        %v831 = vpop.f32.mrb[0].mxu0
        %v832 = vadd.f32 %v700, %v831
        %v833 = vpop.f32.mrb[0].mxu0
        %v834 = vadd.f32 %v704, %v833
        %v835 = vpop.f32.mrb[0].mxu0
        %v836 = vadd.f32 %v700, %v835
        %v837 = vpop.f32.mrb[0].mxu0
        %v838 = vadd.f32 %v704, %v837
        %839 = vmatprep.mubr.bf16.mxu0 0
        %840 = vmatmul.mubr.bf16.gmra.mrb[0].mxu0 %v665
        %v841 = vpop.f32.mrb[0].mxu0
        %v842 = vadd.f32 %v700, %v841
        %v843 = vpop.f32.mrb[0].mxu0
        %v844 = vadd.f32 %v704, %v843
        %v845 = vpop.f32.mrb[0].mxu0
        %v846 = vadd.f32 %v700, %v845
        %v847 = vpop.f32.mrb[0].mxu0
        %v848 = vadd.f32 %v704, %v847
        %849 = vmatprep.mubr.bf16.mxu0 0
        %850 = vmatmul.mubr.bf16.gmra.mrb[0].mxu0 %v666
        %v851 = vpop.f32.mrb[0].mxu0
        %v852 = vadd.f32 %v700, %v851
        %v853 = vpop.f32.mrb[0].mxu0
        %v854 = vadd.f32 %v704, %v853
        %v855 = vpop.f32.mrb[0].mxu0
        %v856 = vadd.f32 %v700, %v855
        %v857 = vpop.f32.mrb[0].mxu0
        %v858 = vadd.f32 %v704, %v857
        %859 = vmatprep.mubr.bf16.mxu0 0
        %860 = vmatmul.mubr.bf16.gmra.mrb[0].mxu0 %v667
        %v861 = vpop.f32.mrb[0].mxu0
        %v862 = vadd.f32 %v700, %v861
        %v863 = vpop.f32.mrb[0].mxu0
        %v864 = vadd.f32 %v704, %v863
        %v865 = vpop.f32.mrb[0].mxu0
        %v866 = vadd.f32 %v700, %v865
        %v867 = vpop.f32.mrb[0].mxu0
        %v868 = vadd.f32 %v704, %v867
        %869 = vmatprep.mubr.bf16.mxu0 0
        %870 = vmatmul.mubr.bf16.gmra.mrb[0].mxu0 %v668
        %v871 = vpop.f32.mrb[0].mxu0
        %v872 = vadd.f32 %v700, %v871
        %v873 = vpop.f32.mrb[0].mxu0
        %v874 = vadd.f32 %v704, %v873
        %v875 = vpop.f32.mrb[0].mxu0
        %v876 = vadd.f32 %v700, %v875
        %v877 = vpop.f32.mrb[0].mxu0
        %v878 = vadd.f32 %v704, %v877
        %879 = vmatprep.mubr.bf16.mxu0 0
        %880 = vmatmul.mubr.bf16.gmra.mrb[0].mxu0 %v669
        %v881 = vpop.f32.mrb[0].mxu0
        %v882 = vadd.f32 %v700, %v881
        %v883 = vpop.f32.mrb[0].mxu0
        %v884 = vadd.f32 %v704, %v883
        %v885 = vpop.f32.mrb[0].mxu0
        %v886 = vadd.f32 %v700, %v885
        %v887 = vpop.f32.mrb[0].mxu0
        %v888 = vadd.f32 %v704, %v887
        %889 = vmatprep.mubr.bf16.mxu0 0
        %890 = vmatmul.mubr.bf16.gmra.mrb[0].mxu0 %v670
        %v891 = vpop.f32.mrb[0].mxu0
        %v892 = vadd.f32 %v700, %v891
        %v893 = vpop.f32.mrb[0].mxu0
        %v894 = vadd.f32 %v704, %v893
        %v895 = vpop.f32.mrb[0].mxu0
        %v896 = vadd.f32 %v700, %v895
        %v897 = vpop.f32.mrb[0].mxu0
        %v898 = vadd.f32 %v704, %v897
        %899 = vmatprep.mubr.bf16.mxu0 0
        %900 = vmatmul.mubr.bf16.gmra.mrb[0].mxu0 %v671
        %v901 = vpop.f32.mrb[0].mxu0
        %v902 = vadd.f32 %v700, %v901
        %v903 = vpop.f32.mrb[0].mxu0
        %v904 = vadd.f32 %v704, %v903
        %v905 = vpop.f32.mrb[0].mxu0
        %v906 = vadd.f32 %v700, %v905
        %v907 = vpop.f32.mrb[0].mxu0
        %v908 = vadd.f32 %v704, %v907
        %909 = vmatprep.mubr.bf16.mxu0 0
        %910 = vmatmul.mubr.bf16.gmra.mrb[0].mxu0 %v672
        %v911 = vpop.f32.mrb[0].mxu0
        %v912 = vadd.f32 %v700, %v911
        %v913 = vpop.f32.mrb[0].mxu0
        %v914 = vadd.f32 %v704, %v913
        %v915 = vpop.f32.mrb[0].mxu0
        %v916 = vadd.f32 %v700, %v915
        %v917 = vpop.f32.mrb[0].mxu0
        %v918 = vadd.f32 %v704, %v917
        %919 = vmatprep.mubr.bf16.mxu0 0
        %920 = vmatmul.mubr.bf16.gmra.mrb[0].mxu0 %v673
        %v921 = vpop.f32.mrb[0].mxu0
        %v922 = vadd.f32 %v700, %v921
        %v923 = vpop.f32.mrb[0].mxu0
        %v924 = vadd.f32 %v704, %v923
        %v925 = vpop.f32.mrb[0].mxu0
        %v926 = vadd.f32 %v700, %v925
        %v927 = vpop.f32.mrb[0].mxu0
        %v928 = vadd.f32 %v704, %v927
        %929 = vmatprep.mubr.bf16.mxu0 0
        %930 = vmatmul.mubr.bf16.gmra.mrb[0].mxu0 %v674
        %v931 = vpop.f32.mrb[0].mxu0
        %v932 = vadd.f32 %v700, %v931
        %v933 = vpop.f32.mrb[0].mxu0
        %v934 = vadd.f32 %v704, %v933
        %v935 = vpop.f32.mrb[0].mxu0
        %v936 = vadd.f32 %v700, %v935
        %v937 = vpop.f32.mrb[0].mxu0
        %v938 = vadd.f32 %v704, %v937
        %939 = vmatprep.mubr.bf16.mxu0 0
        %940 = vmatmul.mubr.bf16.gmra.mrb[0].mxu0 %v675
        %v941 = vpop.f32.mrb[0].mxu0
        %v942 = vadd.f32 %v700, %v941
        %v943 = vpop.f32.mrb[0].mxu0
        %v944 = vadd.f32 %v704, %v943
        %v945 = vpop.f32.mrb[0].mxu0
        %v946 = vadd.f32 %v700, %v945
        %v947 = vpop.f32.mrb[0].mxu0
        %v948 = vadd.f32 %v704, %v947
        %949 = vmatprep.mubr.bf16.mxu0 0
        %950 = vmatmul.mubr.bf16.gmra.mrb[0].mxu0 %v676
        %v951 = vpop.f32.mrb[0].mxu0
        %v952 = vadd.f32 %v700, %v951
        %v953 = vpop.f32.mrb[0].mxu0
        %v954 = vadd.f32 %v704, %v953
        %v955 = vpop.f32.mrb[0].mxu0
        %v956 = vadd.f32 %v700, %v955
        %v957 = vpop.f32.mrb[0].mxu0
        %v958 = vadd.f32 %v704, %v957
        %959 = vmatprep.mubr.bf16.mxu0 0
        %960 = vmatmul.mubr.bf16.gmra.mrb[0].mxu0 %v677
        %v961 = vpop.f32.mrb[0].mxu0
        %v962 = vadd.f32 %v700, %v961
        %v963 = vpop.f32.mrb[0].mxu0
        %v964 = vadd.f32 %v704, %v963
        %v965 = vpop.f32.mrb[0].mxu0
        %v966 = vadd.f32 %v700, %v965
        %v967 = vpop.f32.mrb[0].mxu0
        %v968 = vadd.f32 %v704, %v967
        %969 = vmatprep.mubr.bf16.mxu0 0
        %970 = vmatmul.mubr.bf16.gmra.mrb[0].mxu0 %v678
        %v971 = vpop.f32.mrb[0].mxu0
        %v972 = vadd.f32 %v700, %v971
        %v973 = vpop.f32.mrb[0].mxu0
        %v974 = vadd.f32 %v704, %v973
        %v975 = vpop.f32.mrb[0].mxu0
        %v976 = vadd.f32 %v700, %v975
        %v977 = vpop.f32.mrb[0].mxu0
        %v978 = vadd.f32 %v704, %v977
        %979 = vdwg.mxu0
        %v980 = vxor.u32 %v822, 2147483648
        %v981 = vxor.u32 %v824, 2147483648
        %v982 = vxor.u32 %v826, 2147483648
        %v983 = vxor.u32 %v828, 2147483648
        %v984 = vxor.u32 %v832, 2147483648
        %v985 = vxor.u32 %v834, 2147483648
        %v986 = vxor.u32 %v836, 2147483648
        %v987 = vxor.u32 %v838, 2147483648
        %v988 = vxor.u32 %v842, 2147483648
        %v989 = vxor.u32 %v844, 2147483648
        %v990 = vxor.u32 %v846, 2147483648
        %v991 = vxor.u32 %v848, 2147483648
        %v992 = vxor.u32 %v852, 2147483648
        %v993 = vxor.u32 %v854, 2147483648
        %v994 = vxor.u32 %v856, 2147483648
        %v995 = vxor.u32 %v858, 2147483648
        %v996 = vxor.u32 %v862, 2147483648
        %v997 = vxor.u32 %v864, 2147483648
        %v998 = vxor.u32 %v866, 2147483648
        %v999 = vxor.u32 %v868, 2147483648
        %v1000 = vxor.u32 %v872, 2147483648
        %v1001 = vxor.u32 %v874, 2147483648
        %v1002 = vxor.u32 %v876, 2147483648
        %v1003 = vxor.u32 %v878, 2147483648
        %v1004 = vxor.u32 %v882, 2147483648
        %v1005 = vxor.u32 %v884, 2147483648
        %v1006 = vxor.u32 %v886, 2147483648
        %v1007 = vxor.u32 %v888, 2147483648
        %v1008 = vxor.u32 %v892, 2147483648
        %v1009 = vxor.u32 %v894, 2147483648
        %v1010 = vxor.u32 %v896, 2147483648
        %v1011 = vxor.u32 %v898, 2147483648
        %v1012 = vxor.u32 %v902, 2147483648
        %v1013 = vxor.u32 %v904, 2147483648
        %v1014 = vxor.u32 %v906, 2147483648
        %v1015 = vxor.u32 %v908, 2147483648
        %v1016 = vxor.u32 %v912, 2147483648
        %v1017 = vxor.u32 %v914, 2147483648
        %v1018 = vxor.u32 %v916, 2147483648
        %v1019 = vxor.u32 %v918, 2147483648
        %v1020 = vxor.u32 %v922, 2147483648
        %v1021 = vxor.u32 %v924, 2147483648
        %v1022 = vxor.u32 %v926, 2147483648
        %v1023 = vxor.u32 %v928, 2147483648
        %v1024 = vxor.u32 %v932, 2147483648
        %v1025 = vxor.u32 %v934, 2147483648
        %v1026 = vxor.u32 %v936, 2147483648
        %v1027 = vxor.u32 %v938, 2147483648
        %v1028 = vxor.u32 %v942, 2147483648
        %v1029 = vxor.u32 %v944, 2147483648
        %v1030 = vxor.u32 %v946, 2147483648
        %v1031 = vxor.u32 %v948, 2147483648
        %v1032 = vxor.u32 %v952, 2147483648
        %v1033 = vxor.u32 %v954, 2147483648
        %v1034 = vxor.u32 %v956, 2147483648
        %v1035 = vxor.u32 %v958, 2147483648
        %v1036 = vxor.u32 %v962, 2147483648
        %v1037 = vxor.u32 %v964, 2147483648
        %v1038 = vxor.u32 %v966, 2147483648
        %v1039 = vxor.u32 %v968, 2147483648
        %v1040 = vxor.u32 %v972, 2147483648
        %v1041 = vxor.u32 %v974, 2147483648
        %v1042 = vxor.u32 %v976, 2147483648
        %v1043 = vxor.u32 %v978, 2147483648
        %v1044 = vmul.f32 %v980, 1.442695
        %v1045 = vpow.pop %v1044
        %v1046 = vmul.f32 %v981, 1.442695
        %v1047 = vpow.pop %v1046
        %v1048 = vmul.f32 %v982, 1.442695
        %v1049 = vpow.pop %v1048
        %v1050 = vmul.f32 %v983, 1.442695
        %v1051 = vpow.pop %v1050
        %v1052 = vmul.f32 %v984, 1.442695
        %v1053 = vpow.pop %v1052
        %v1054 = vmul.f32 %v985, 1.442695
        %v1055 = vpow.pop %v1054
        %v1056 = vmul.f32 %v986, 1.442695
        %v1057 = vpow.pop %v1056
        %v1058 = vmul.f32 %v987, 1.442695
        %v1059 = vpow.pop %v1058
        %v1060 = vmul.f32 %v988, 1.442695
        %v1061 = vpow.pop %v1060
        %v1062 = vmul.f32 %v989, 1.442695
        %v1063 = vpow.pop %v1062
        %v1064 = vmul.f32 %v990, 1.442695
        %v1065 = vpow.pop %v1064
        %v1066 = vmul.f32 %v991, 1.442695
        %v1067 = vpow.pop %v1066
        %v1068 = vmul.f32 %v992, 1.442695
        %v1069 = vpow.pop %v1068
        %v1070 = vmul.f32 %v993, 1.442695
        %v1071 = vpow.pop %v1070
        %v1072 = vmul.f32 %v994, 1.442695
        %v1073 = vpow.pop %v1072
        %v1074 = vmul.f32 %v995, 1.442695
        %v1075 = vpow.pop %v1074
        %v1076 = vmul.f32 %v996, 1.442695
        %v1077 = vpow.pop %v1076
        %v1078 = vmul.f32 %v997, 1.442695
        %v1079 = vpow.pop %v1078
        %v1080 = vmul.f32 %v998, 1.442695
        %v1081 = vpow.pop %v1080
        %v1082 = vmul.f32 %v999, 1.442695
        %v1083 = vpow.pop %v1082
        %v1084 = vmul.f32 %v1000, 1.442695
        %v1085 = vpow.pop %v1084
        %v1086 = vmul.f32 %v1001, 1.442695
        %v1087 = vpow.pop %v1086
        %v1088 = vmul.f32 %v1002, 1.442695
        %v1089 = vpow.pop %v1088
        %v1090 = vmul.f32 %v1003, 1.442695
        %v1091 = vpow.pop %v1090
        %v1092 = vmul.f32 %v1004, 1.442695
        %v1093 = vpow.pop %v1092
        %v1094 = vmul.f32 %v1005, 1.442695
        %v1095 = vpow.pop %v1094
        %v1096 = vmul.f32 %v1006, 1.442695
        %v1097 = vpow.pop %v1096
        %v1098 = vmul.f32 %v1007, 1.442695
        %v1099 = vpow.pop %v1098
        %v1100 = vmul.f32 %v1008, 1.442695
        %v1101 = vpow.pop %v1100
        %v1102 = vmul.f32 %v1009, 1.442695
        %v1103 = vpow.pop %v1102
        %v1104 = vmul.f32 %v1010, 1.442695
        %v1105 = vpow.pop %v1104
        %v1106 = vmul.f32 %v1011, 1.442695
        %v1107 = vpow.pop %v1106
        %v1108 = vmul.f32 %v1012, 1.442695
        %v1109 = vpow.pop %v1108
        %v1110 = vmul.f32 %v1013, 1.442695
        %v1111 = vpow.pop %v1110
        %v1112 = vmul.f32 %v1014, 1.442695
        %v1113 = vpow.pop %v1112
        %v1114 = vmul.f32 %v1015, 1.442695
        %v1115 = vpow.pop %v1114
        %v1116 = vmul.f32 %v1016, 1.442695
        %v1117 = vpow.pop %v1116
        %v1118 = vmul.f32 %v1017, 1.442695
        %v1119 = vpow.pop %v1118
        %v1120 = vmul.f32 %v1018, 1.442695
        %v1121 = vpow.pop %v1120
        %v1122 = vmul.f32 %v1019, 1.442695
        %v1123 = vpow.pop %v1122
        %v1124 = vmul.f32 %v1020, 1.442695
        %v1125 = vpow.pop %v1124
        %v1126 = vmul.f32 %v1021, 1.442695
        %v1127 = vpow.pop %v1126
        %v1128 = vmul.f32 %v1022, 1.442695
        %v1129 = vpow.pop %v1128
        %v1130 = vmul.f32 %v1023, 1.442695
        %v1131 = vpow.pop %v1130
        %v1132 = vmul.f32 %v1024, 1.442695
        %v1133 = vpow.pop %v1132
        %v1134 = vmul.f32 %v1025, 1.442695
        %v1135 = vpow.pop %v1134
        %v1136 = vmul.f32 %v1026, 1.442695
        %v1137 = vpow.pop %v1136
        %v1138 = vmul.f32 %v1027, 1.442695
        %v1139 = vpow.pop %v1138
        %v1140 = vmul.f32 %v1028, 1.442695
        %v1141 = vpow.pop %v1140
        %v1142 = vmul.f32 %v1029, 1.442695
        %v1143 = vpow.pop %v1142
        %v1144 = vmul.f32 %v1030, 1.442695
        %v1145 = vpow.pop %v1144
        %v1146 = vmul.f32 %v1031, 1.442695
        %v1147 = vpow.pop %v1146
        %v1148 = vmul.f32 %v1032, 1.442695
        %v1149 = vpow.pop %v1148
        %v1150 = vmul.f32 %v1033, 1.442695
        %v1151 = vpow.pop %v1150
        %v1152 = vmul.f32 %v1034, 1.442695
        %v1153 = vpow.pop %v1152
        %v1154 = vmul.f32 %v1035, 1.442695
        %v1155 = vpow.pop %v1154
        %v1156 = vmul.f32 %v1036, 1.442695
        %v1157 = vpow.pop %v1156
        %v1158 = vmul.f32 %v1037, 1.442695
        %v1159 = vpow.pop %v1158
        %v1160 = vmul.f32 %v1038, 1.442695
        %v1161 = vpow.pop %v1160
        %v1162 = vmul.f32 %v1039, 1.442695
        %v1163 = vpow.pop %v1162
        %v1164 = vmul.f32 %v1040, 1.442695
        %v1165 = vpow.pop %v1164
        %v1166 = vmul.f32 %v1041, 1.442695
        %v1167 = vpow.pop %v1166
        %v1168 = vmul.f32 %v1042, 1.442695
        %v1169 = vpow.pop %v1168
        %v1170 = vmul.f32 %v1043, 1.442695
        %v1171 = vpow.pop %v1170
        %v1172 = vadd.f32 %v1045, 1.0
        %v1173 = vadd.f32 %v1047, 1.0
        %v1174 = vadd.f32 %v1049, 1.0
        %v1175 = vadd.f32 %v1051, 1.0
        %v1176 = vadd.f32 %v1053, 1.0
        %v1177 = vadd.f32 %v1055, 1.0
        %v1178 = vadd.f32 %v1057, 1.0
        %v1179 = vadd.f32 %v1059, 1.0
        %v1180 = vadd.f32 %v1061, 1.0
        %v1181 = vadd.f32 %v1063, 1.0
        %v1182 = vadd.f32 %v1065, 1.0
        %v1183 = vadd.f32 %v1067, 1.0
        %v1184 = vadd.f32 %v1069, 1.0
        %v1185 = vadd.f32 %v1071, 1.0
        %v1186 = vadd.f32 %v1073, 1.0
        %v1187 = vadd.f32 %v1075, 1.0
        %v1188 = vadd.f32 %v1077, 1.0
        %v1189 = vadd.f32 %v1079, 1.0
        %v1190 = vadd.f32 %v1081, 1.0
        %v1191 = vadd.f32 %v1083, 1.0
        %v1192 = vadd.f32 %v1085, 1.0
        %v1193 = vadd.f32 %v1087, 1.0
        %v1194 = vadd.f32 %v1089, 1.0
        %v1195 = vadd.f32 %v1091, 1.0
        %v1196 = vadd.f32 %v1093, 1.0
        %v1197 = vadd.f32 %v1095, 1.0
        %v1198 = vadd.f32 %v1097, 1.0
        %v1199 = vadd.f32 %v1099, 1.0
        %v1200 = vadd.f32 %v1101, 1.0
        %v1201 = vadd.f32 %v1103, 1.0
        %v1202 = vadd.f32 %v1105, 1.0
        %v1203 = vadd.f32 %v1107, 1.0
        %v1204 = vadd.f32 %v1109, 1.0
        %v1205 = vadd.f32 %v1111, 1.0
        %v1206 = vadd.f32 %v1113, 1.0
        %v1207 = vadd.f32 %v1115, 1.0
        %v1208 = vadd.f32 %v1117, 1.0
        %v1209 = vadd.f32 %v1119, 1.0
        %v1210 = vadd.f32 %v1121, 1.0
        %v1211 = vadd.f32 %v1123, 1.0
        %v1212 = vadd.f32 %v1125, 1.0
        %v1213 = vadd.f32 %v1127, 1.0
        %v1214 = vadd.f32 %v1129, 1.0
        %v1215 = vadd.f32 %v1131, 1.0
        %v1216 = vadd.f32 %v1133, 1.0
        %v1217 = vadd.f32 %v1135, 1.0
        %v1218 = vadd.f32 %v1137, 1.0
        %v1219 = vadd.f32 %v1139, 1.0
        %v1220 = vadd.f32 %v1141, 1.0
        %v1221 = vadd.f32 %v1143, 1.0
        %v1222 = vadd.f32 %v1145, 1.0
        %v1223 = vadd.f32 %v1147, 1.0
        %v1224 = vadd.f32 %v1149, 1.0
        %v1225 = vadd.f32 %v1151, 1.0
        %v1226 = vadd.f32 %v1153, 1.0
        %v1227 = vadd.f32 %v1155, 1.0
        %v1228 = vadd.f32 %v1157, 1.0
        %v1229 = vadd.f32 %v1159, 1.0
        %v1230 = vadd.f32 %v1161, 1.0
        %v1231 = vadd.f32 %v1163, 1.0
        %v1232 = vadd.f32 %v1165, 1.0
        %v1233 = vadd.f32 %v1167, 1.0
        %v1234 = vadd.f32 %v1169, 1.0
        %v1235 = vadd.f32 %v1171, 1.0
        %v1236 = vrcp.pop %v1172
        %v1237 = vmul.f32 1.0, %v1236
        %v1238 = vrcp.pop %v1173
        %v1239 = vmul.f32 1.0, %v1238
        %v1240 = vrcp.pop %v1174
        %v1241 = vmul.f32 1.0, %v1240
        %v1242 = vrcp.pop %v1175
        %v1243 = vmul.f32 1.0, %v1242
        %v1244 = vrcp.pop %v1176
        %v1245 = vmul.f32 1.0, %v1244
        %v1246 = vrcp.pop %v1177
        %v1247 = vmul.f32 1.0, %v1246
        %v1248 = vrcp.pop %v1178
        %v1249 = vmul.f32 1.0, %v1248
        %v1250 = vrcp.pop %v1179
        %v1251 = vmul.f32 1.0, %v1250
        %v1252 = vrcp.pop %v1180
        %v1253 = vmul.f32 1.0, %v1252
        %v1254 = vrcp.pop %v1181
        %v1255 = vmul.f32 1.0, %v1254
        %v1256 = vrcp.pop %v1182
        %v1257 = vmul.f32 1.0, %v1256
        %v1258 = vrcp.pop %v1183
        %v1259 = vmul.f32 1.0, %v1258
        %v1260 = vrcp.pop %v1184
        %v1261 = vmul.f32 1.0, %v1260
        %v1262 = vrcp.pop %v1185
        %v1263 = vmul.f32 1.0, %v1262
        %v1264 = vrcp.pop %v1186
        %v1265 = vmul.f32 1.0, %v1264
        %v1266 = vrcp.pop %v1187
        %v1267 = vmul.f32 1.0, %v1266
        %v1268 = vrcp.pop %v1188
        %v1269 = vmul.f32 1.0, %v1268
        %v1270 = vrcp.pop %v1189
        %v1271 = vmul.f32 1.0, %v1270
        %v1272 = vrcp.pop %v1190
        %v1273 = vmul.f32 1.0, %v1272
        %v1274 = vrcp.pop %v1191
        %v1275 = vmul.f32 1.0, %v1274
        %v1276 = vrcp.pop %v1192
        %v1277 = vmul.f32 1.0, %v1276
        %v1278 = vrcp.pop %v1193
        %v1279 = vmul.f32 1.0, %v1278
        %v1280 = vrcp.pop %v1194
        %v1281 = vmul.f32 1.0, %v1280
        %v1282 = vrcp.pop %v1195
        %v1283 = vmul.f32 1.0, %v1282
        %v1284 = vrcp.pop %v1196
        %v1285 = vmul.f32 1.0, %v1284
        %v1286 = vrcp.pop %v1197
        %v1287 = vmul.f32 1.0, %v1286
        %v1288 = vrcp.pop %v1198
        %v1289 = vmul.f32 1.0, %v1288
        %v1290 = vrcp.pop %v1199
        %v1291 = vmul.f32 1.0, %v1290
        %v1292 = vrcp.pop %v1200
        %v1293 = vmul.f32 1.0, %v1292
        %v1294 = vrcp.pop %v1201
        %v1295 = vmul.f32 1.0, %v1294
        %v1296 = vrcp.pop %v1202
        %v1297 = vmul.f32 1.0, %v1296
        %v1298 = vrcp.pop %v1203
        %v1299 = vmul.f32 1.0, %v1298
        %v1300 = vrcp.pop %v1204
        %v1301 = vmul.f32 1.0, %v1300
        %v1302 = vrcp.pop %v1205
        %v1303 = vmul.f32 1.0, %v1302
        %v1304 = vrcp.pop %v1206
        %v1305 = vmul.f32 1.0, %v1304
        %v1306 = vrcp.pop %v1207
        %v1307 = vmul.f32 1.0, %v1306
        %v1308 = vrcp.pop %v1208
        %v1309 = vmul.f32 1.0, %v1308
        %v1310 = vrcp.pop %v1209
        %v1311 = vmul.f32 1.0, %v1310
        %v1312 = vrcp.pop %v1210
        %v1313 = vmul.f32 1.0, %v1312
        %v1314 = vrcp.pop %v1211
        %v1315 = vmul.f32 1.0, %v1314
        %v1316 = vrcp.pop %v1212
        %v1317 = vmul.f32 1.0, %v1316
        %v1318 = vrcp.pop %v1213
        %v1319 = vmul.f32 1.0, %v1318
        %v1320 = vrcp.pop %v1214
        %v1321 = vmul.f32 1.0, %v1320
        %v1322 = vrcp.pop %v1215
        %v1323 = vmul.f32 1.0, %v1322
        %v1324 = vrcp.pop %v1216
        %v1325 = vmul.f32 1.0, %v1324
        %v1326 = vrcp.pop %v1217
        %v1327 = vmul.f32 1.0, %v1326
        %v1328 = vrcp.pop %v1218
        %v1329 = vmul.f32 1.0, %v1328
        %v1330 = vrcp.pop %v1219
        %v1331 = vmul.f32 1.0, %v1330
        %v1332 = vrcp.pop %v1220
        %v1333 = vmul.f32 1.0, %v1332
        %v1334 = vrcp.pop %v1221
        %v1335 = vmul.f32 1.0, %v1334
        %v1336 = vrcp.pop %v1222
        %v1337 = vmul.f32 1.0, %v1336
        %v1338 = vrcp.pop %v1223
        %v1339 = vmul.f32 1.0, %v1338
        %v1340 = vrcp.pop %v1224
        %v1341 = vmul.f32 1.0, %v1340
        %v1342 = vrcp.pop %v1225
        %v1343 = vmul.f32 1.0, %v1342
        %v1344 = vrcp.pop %v1226
        %v1345 = vmul.f32 1.0, %v1344
        %v1346 = vrcp.pop %v1227
        %v1347 = vmul.f32 1.0, %v1346
        %v1348 = vrcp.pop %v1228
        %v1349 = vmul.f32 1.0, %v1348
        %v1350 = vrcp.pop %v1229
        %v1351 = vmul.f32 1.0, %v1350
        %v1352 = vrcp.pop %v1230
        %v1353 = vmul.f32 1.0, %v1352
        %v1354 = vrcp.pop %v1231
        %v1355 = vmul.f32 1.0, %v1354
        %v1356 = vrcp.pop %v1232
        %v1357 = vmul.f32 1.0, %v1356
        %v1358 = vrcp.pop %v1233
        %v1359 = vmul.f32 1.0, %v1358
        %v1360 = vrcp.pop %v1234
        %v1361 = vmul.f32 1.0, %v1360
        %v1362 = vrcp.pop %v1235
        %v1363 = vmul.f32 1.0, %v1362
        %v1364 = vmul.f32 %v822, %v1237
        %v1365 = vmul.f32 %v824, %v1239
        %v1366 = vmul.f32 %v826, %v1241
        %v1367 = vmul.f32 %v828, %v1243
        %v1368 = vmul.f32 %v832, %v1245
        %v1369 = vmul.f32 %v834, %v1247
        %v1370 = vmul.f32 %v836, %v1249
        %v1371 = vmul.f32 %v838, %v1251
        %v1372 = vmul.f32 %v842, %v1253
        %v1373 = vmul.f32 %v844, %v1255
        %v1374 = vmul.f32 %v846, %v1257
        %v1375 = vmul.f32 %v848, %v1259
        %v1376 = vmul.f32 %v852, %v1261
        %v1377 = vmul.f32 %v854, %v1263
        %v1378 = vmul.f32 %v856, %v1265
        %v1379 = vmul.f32 %v858, %v1267
        %v1380 = vmul.f32 %v862, %v1269
        %v1381 = vmul.f32 %v864, %v1271
        %v1382 = vmul.f32 %v866, %v1273
        %v1383 = vmul.f32 %v868, %v1275
        %v1384 = vmul.f32 %v872, %v1277
        %v1385 = vmul.f32 %v874, %v1279
        %v1386 = vmul.f32 %v876, %v1281
        %v1387 = vmul.f32 %v878, %v1283
        %v1388 = vmul.f32 %v882, %v1285
        %v1389 = vmul.f32 %v884, %v1287
        %v1390 = vmul.f32 %v886, %v1289
        %v1391 = vmul.f32 %v888, %v1291
        %v1392 = vmul.f32 %v892, %v1293
        %v1393 = vmul.f32 %v894, %v1295
        %v1394 = vmul.f32 %v896, %v1297
        %v1395 = vmul.f32 %v898, %v1299
        %v1396 = vmul.f32 %v902, %v1301
        %v1397 = vmul.f32 %v904, %v1303
        %v1398 = vmul.f32 %v906, %v1305
        %v1399 = vmul.f32 %v908, %v1307
        %v1400 = vmul.f32 %v912, %v1309
        %v1401 = vmul.f32 %v914, %v1311
        %v1402 = vmul.f32 %v916, %v1313
        %v1403 = vmul.f32 %v918, %v1315
        %v1404 = vmul.f32 %v922, %v1317
        %v1405 = vmul.f32 %v924, %v1319
        %v1406 = vmul.f32 %v926, %v1321
        %v1407 = vmul.f32 %v928, %v1323
        %v1408 = vmul.f32 %v932, %v1325
        %v1409 = vmul.f32 %v934, %v1327
        %v1410 = vmul.f32 %v936, %v1329
        %v1411 = vmul.f32 %v938, %v1331
        %v1412 = vmul.f32 %v942, %v1333
        %v1413 = vmul.f32 %v944, %v1335
        %v1414 = vmul.f32 %v946, %v1337
        %v1415 = vmul.f32 %v948, %v1339
        %v1416 = vmul.f32 %v952, %v1341
        %v1417 = vmul.f32 %v954, %v1343
        %v1418 = vmul.f32 %v956, %v1345
        %v1419 = vmul.f32 %v958, %v1347
        %v1420 = vmul.f32 %v962, %v1349
        %v1421 = vmul.f32 %v964, %v1351
        %v1422 = vmul.f32 %v966, %v1353
        %v1423 = vmul.f32 %v968, %v1355
        %v1424 = vmul.f32 %v972, %v1357
        %v1425 = vmul.f32 %v974, %v1359
        %v1426 = vmul.f32 %v976, %v1361
        %v1427 = vmul.f32 %v978, %v1363
        %v1428 = vpack.c.bf16 %v1366, %v1364
        %v1429 = vpack.c.bf16 %v1367, %v1365
        %v1430 = vpack.c.bf16 %v1370, %v1368
        %v1431 = vpack.c.bf16 %v1371, %v1369
        %v1432 = vpack.c.bf16 %v1374, %v1372
        %v1433 = vpack.c.bf16 %v1375, %v1373
        %v1434 = vpack.c.bf16 %v1378, %v1376
        %v1435 = vpack.c.bf16 %v1379, %v1377
        %v1436 = vpack.c.bf16 %v1382, %v1380
        %v1437 = vpack.c.bf16 %v1383, %v1381
        %v1438 = vpack.c.bf16 %v1386, %v1384
        %v1439 = vpack.c.bf16 %v1387, %v1385
        %v1440 = vpack.c.bf16 %v1390, %v1388
        %v1441 = vpack.c.bf16 %v1391, %v1389
        %v1442 = vpack.c.bf16 %v1394, %v1392
        %v1443 = vpack.c.bf16 %v1395, %v1393
        %v1444 = vpack.c.bf16 %v1398, %v1396
        %v1445 = vpack.c.bf16 %v1399, %v1397
        %v1446 = vpack.c.bf16 %v1402, %v1400
        %v1447 = vpack.c.bf16 %v1403, %v1401
        %v1448 = vpack.c.bf16 %v1406, %v1404
        %v1449 = vpack.c.bf16 %v1407, %v1405
        %v1450 = vpack.c.bf16 %v1410, %v1408
        %v1451 = vpack.c.bf16 %v1411, %v1409
        %v1452 = vpack.c.bf16 %v1414, %v1412
        %v1453 = vpack.c.bf16 %v1415, %v1413
        %v1454 = vpack.c.bf16 %v1418, %v1416
        %v1455 = vpack.c.bf16 %v1419, %v1417
        %v1456 = vpack.c.bf16 %v1422, %v1420
        %v1457 = vpack.c.bf16 %v1423, %v1421
        %v1458 = vpack.c.bf16 %v1426, %v1424
        %v1459 = vpack.c.bf16 %v1427, %v1425
        %v1460 = vpack.c.bf16 %v330, %v329
        %v1461 = vpack.c.bf16 %v332, %v331
        %v1462 = vpack.c.bf16 %v334, %v333
        %v1463 = vpack.c.bf16 %v336, %v335
        %v1464 = vpack.c.bf16 %v338, %v337
        %v1465 = vpack.c.bf16 %v340, %v339
        %v1466 = vpack.c.bf16 %v342, %v341
        %v1467 = vpack.c.bf16 %v344, %v343
        %v1468 = vpack.c.bf16 %v346, %v345
        %v1469 = vpack.c.bf16 %v348, %v347
        %v1470 = vpack.c.bf16 %v350, %v349
        %v1471 = vpack.c.bf16 %v352, %v351
        %v1472 = vpack.c.bf16 %v354, %v353
        %v1473 = vpack.c.bf16 %v356, %v355
        %v1474 = vpack.c.bf16 %v358, %v357
        %v1475 = vpack.c.bf16 %v360, %v359
        %v1476 = vld [vmem:[#allocation7] sm:$0xff]
        %v1477 = vld [vmem:[#allocation7 + $0x8] sm:$0xff]
        %v1478 = vld [vmem:[#allocation7 + $0x10] sm:$0xff]
        %v1479 = vld [vmem:[#allocation7 + $0x18] sm:$0xff]
        %v1480 = vld [vmem:[#allocation7 + $0x20] sm:$0xff]
        %v1481 = vld [vmem:[#allocation7 + $0x28] sm:$0xff]
        %v1482 = vld [vmem:[#allocation7 + $0x30] sm:$0xff]
        %v1483 = vld [vmem:[#allocation7 + $0x38] sm:$0xff]
        %v1484 = vld [vmem:[#allocation7 + $0x40] sm:$0xff]
        %v1485 = vld [vmem:[#allocation7 + $0x48] sm:$0xff]
        %v1486 = vld [vmem:[#allocation7 + $0x50] sm:$0xff]
        %v1487 = vld [vmem:[#allocation7 + $0x58] sm:$0xff]
        %v1488 = vld [vmem:[#allocation7 + $0x60] sm:$0xff]
        %v1489 = vld [vmem:[#allocation7 + $0x68] sm:$0xff]
        %v1490 = vld [vmem:[#allocation7 + $0x70] sm:$0xff]
        %v1491 = vld [vmem:[#allocation7 + $0x78] sm:$0xff]
        %v1492 = vld [vmem:[#allocation7 + $0x80] sm:$0xff]
        %v1493 = vld [vmem:[#allocation7 + $0x88] sm:$0xff]
        %v1494 = vld [vmem:[#allocation7 + $0x90] sm:$0xff]
        %v1495 = vld [vmem:[#allocation7 + $0x98] sm:$0xff]
        %v1496 = vld [vmem:[#allocation7 + $0xa0] sm:$0xff]
        %v1497 = vld [vmem:[#allocation7 + $0xa8] sm:$0xff]
        %v1498 = vld [vmem:[#allocation7 + $0xb0] sm:$0xff]
        %v1499 = vld [vmem:[#allocation7 + $0xb8] sm:$0xff]
        %v1500 = vld [vmem:[#allocation7 + $0xc0] sm:$0xff]
        %v1501 = vld [vmem:[#allocation7 + $0xc8] sm:$0xff]
        %v1502 = vld [vmem:[#allocation7 + $0xd0] sm:$0xff]
        %v1503 = vld [vmem:[#allocation7 + $0xd8] sm:$0xff]
        %v1504 = vld [vmem:[#allocation7 + $0xe0] sm:$0xff]
        %v1505 = vld [vmem:[#allocation7 + $0xe8] sm:$0xff]
        %v1506 = vld [vmem:[#allocation7 + $0xf0] sm:$0xff]
        %v1507 = vld [vmem:[#allocation7 + $0xf8] sm:$0xff]
        %v1508 = vld [vmem:[#allocation7 + $0x100] sm:$0xff]
        %v1509 = vld [vmem:[#allocation7 + $0x108] sm:$0xff]
        %v1510 = vld [vmem:[#allocation7 + $0x110] sm:$0xff]
        %v1511 = vld [vmem:[#allocation7 + $0x118] sm:$0xff]
        %v1512 = vld [vmem:[#allocation7 + $0x120] sm:$0xff]
        %v1513 = vld [vmem:[#allocation7 + $0x128] sm:$0xff]
        %v1514 = vld [vmem:[#allocation7 + $0x130] sm:$0xff]
        %v1515 = vld [vmem:[#allocation7 + $0x138] sm:$0xff]
        %v1516 = vld [vmem:[#allocation7 + $0x140] sm:$0xff]
        %v1517 = vld [vmem:[#allocation7 + $0x148] sm:$0xff]
        %v1518 = vld [vmem:[#allocation7 + $0x150] sm:$0xff]
        %v1519 = vld [vmem:[#allocation7 + $0x158] sm:$0xff]
        %v1520 = vld [vmem:[#allocation7 + $0x160] sm:$0xff]
        %v1521 = vld [vmem:[#allocation7 + $0x168] sm:$0xff]
        %v1522 = vld [vmem:[#allocation7 + $0x170] sm:$0xff]
        %v1523 = vld [vmem:[#allocation7 + $0x178] sm:$0xff]
        %v1524 = vld [vmem:[%s6] sm:$0x3]
        %v1526 = vlaneseq
        %v1527 = vshrl.u32 %v1526, 7
        %v1528 = vsub.s32 0, %v1527
        %v1529 = vrot.slane %v1524, %v1528
        %v1530 = vlaneseq
        %v1531 = vshrl.u32 %v1530, 7
        %v1532 = vsub.s32 1, %v1531
        %v1533 = vrot.slane %v1524, %v1532
        %v1584 = vunpack.c.l.b16 %v1476
        %v1585 = vunpack.c.h.b16 %v1476
        %v1586 = vunpack.c.l.b16 %v1477
        %v1587 = vunpack.c.h.b16 %v1477
        %v1588 = vunpack.c.l.b16 %v1478
        %v1589 = vunpack.c.h.b16 %v1478
        %v1590 = vunpack.c.l.b16 %v1479
        %v1591 = vunpack.c.h.b16 %v1479
        %v1592 = vunpack.c.l.b16 %v1480
        %v1593 = vunpack.c.h.b16 %v1480
        %v1594 = vunpack.c.l.b16 %v1481
        %v1595 = vunpack.c.h.b16 %v1481
        %v1596 = vunpack.c.l.b16 %v1482
        %v1597 = vunpack.c.h.b16 %v1482
        %v1598 = vunpack.c.l.b16 %v1483
        %v1599 = vunpack.c.h.b16 %v1483
        %v1600 = vunpack.c.l.b16 %v1484
        %v1601 = vunpack.c.h.b16 %v1484
        %v1602 = vunpack.c.l.b16 %v1485
        %v1603 = vunpack.c.h.b16 %v1485
        %v1604 = vunpack.c.l.b16 %v1486
        %v1605 = vunpack.c.h.b16 %v1486
        %v1606 = vunpack.c.l.b16 %v1487
        %v1607 = vunpack.c.h.b16 %v1487
        %v1608 = vunpack.c.l.b16 %v1488
        %v1609 = vunpack.c.h.b16 %v1488
        %v1610 = vunpack.c.l.b16 %v1489
        %v1611 = vunpack.c.h.b16 %v1489
        %v1612 = vunpack.c.l.b16 %v1490
        %v1613 = vunpack.c.h.b16 %v1490
        %v1614 = vunpack.c.l.b16 %v1491
        %v1615 = vunpack.c.h.b16 %v1491
        %v1616 = vunpack.c.l.b16 %v1492
        %v1617 = vunpack.c.h.b16 %v1492
        %v1618 = vunpack.c.l.b16 %v1493
        %v1619 = vunpack.c.h.b16 %v1493
        %v1620 = vunpack.c.l.b16 %v1494
        %v1621 = vunpack.c.h.b16 %v1494
        %v1622 = vunpack.c.l.b16 %v1495
        %v1623 = vunpack.c.h.b16 %v1495
        %v1624 = vunpack.c.l.b16 %v1496
        %v1625 = vunpack.c.h.b16 %v1496
        %v1626 = vunpack.c.l.b16 %v1497
        %v1627 = vunpack.c.h.b16 %v1497
        %v1628 = vunpack.c.l.b16 %v1498
        %v1629 = vunpack.c.h.b16 %v1498
        %v1630 = vunpack.c.l.b16 %v1499
        %v1631 = vunpack.c.h.b16 %v1499
        %v1632 = vunpack.c.l.b16 %v1500
        %v1633 = vunpack.c.h.b16 %v1500
        %v1634 = vunpack.c.l.b16 %v1501
        %v1635 = vunpack.c.h.b16 %v1501
        %v1636 = vunpack.c.l.b16 %v1502
        %v1637 = vunpack.c.h.b16 %v1502
        %v1638 = vunpack.c.l.b16 %v1503
        %v1639 = vunpack.c.h.b16 %v1503
        %v1640 = vunpack.c.l.b16 %v1504
        %v1641 = vunpack.c.h.b16 %v1504
        %v1642 = vunpack.c.l.b16 %v1505
        %v1643 = vunpack.c.h.b16 %v1505
        %v1644 = vunpack.c.l.b16 %v1506
        %v1645 = vunpack.c.h.b16 %v1506
        %v1646 = vunpack.c.l.b16 %v1507
        %v1647 = vunpack.c.h.b16 %v1507
        %v1648 = vunpack.c.l.b16 %v1508
        %v1649 = vunpack.c.h.b16 %v1508
        %v1650 = vunpack.c.l.b16 %v1509
        %v1651 = vunpack.c.h.b16 %v1509
        %v1652 = vunpack.c.l.b16 %v1510
        %v1653 = vunpack.c.h.b16 %v1510
        %v1654 = vunpack.c.l.b16 %v1511
        %v1655 = vunpack.c.h.b16 %v1511
        %v1656 = vunpack.c.l.b16 %v1512
        %v1657 = vunpack.c.h.b16 %v1512
        %v1658 = vunpack.c.l.b16 %v1513
        %v1659 = vunpack.c.h.b16 %v1513
        %v1660 = vunpack.c.l.b16 %v1514
        %v1661 = vunpack.c.h.b16 %v1514
        %v1662 = vunpack.c.l.b16 %v1515
        %v1663 = vunpack.c.h.b16 %v1515
        %v1664 = vunpack.c.l.b16 %v1516
        %v1665 = vunpack.c.h.b16 %v1516
        %v1666 = vunpack.c.l.b16 %v1517
        %v1667 = vunpack.c.h.b16 %v1517
        %v1668 = vunpack.c.l.b16 %v1518
        %v1669 = vunpack.c.h.b16 %v1518
        %v1670 = vunpack.c.l.b16 %v1519
        %v1671 = vunpack.c.h.b16 %v1519
        %v1672 = vunpack.c.l.b16 %v1520
        %v1673 = vunpack.c.h.b16 %v1520
        %v1674 = vunpack.c.l.b16 %v1521
        %v1675 = vunpack.c.h.b16 %v1521
        %v1676 = vunpack.c.l.b16 %v1522
        %v1677 = vunpack.c.h.b16 %v1522
        %v1678 = vunpack.c.l.b16 %v1523
        %v1679 = vunpack.c.h.b16 %v1523
        %v1680 = vpack.c.b16 %v1586, %v1584
        %v1681 = vpack.c.b16 %v1587, %v1585
        %v1682 = vpack.c.b16 %v1590, %v1588
        %v1683 = vpack.c.b16 %v1591, %v1589
        %v1684 = vpack.c.b16 %v1594, %v1592
        %v1685 = vpack.c.b16 %v1595, %v1593
        %v1686 = vpack.c.b16 %v1598, %v1596
        %v1687 = vpack.c.b16 %v1599, %v1597
        %v1688 = vpack.c.b16 %v1602, %v1600
        %v1689 = vpack.c.b16 %v1603, %v1601
        %v1690 = vpack.c.b16 %v1606, %v1604
        %v1691 = vpack.c.b16 %v1607, %v1605
        %v1692 = vpack.c.b16 %v1610, %v1608
        %v1693 = vpack.c.b16 %v1611, %v1609
        %v1694 = vpack.c.b16 %v1614, %v1612
        %v1695 = vpack.c.b16 %v1615, %v1613
        %v1696 = vpack.c.b16 %v1618, %v1616
        %v1697 = vpack.c.b16 %v1619, %v1617
        %v1698 = vpack.c.b16 %v1622, %v1620
        %v1699 = vpack.c.b16 %v1623, %v1621
        %v1700 = vpack.c.b16 %v1626, %v1624
        %v1701 = vpack.c.b16 %v1627, %v1625
        %v1702 = vpack.c.b16 %v1630, %v1628
        %v1703 = vpack.c.b16 %v1631, %v1629
        %v1704 = vpack.c.b16 %v1634, %v1632
        %v1705 = vpack.c.b16 %v1635, %v1633
        %v1706 = vpack.c.b16 %v1638, %v1636
        %v1707 = vpack.c.b16 %v1639, %v1637
        %v1708 = vpack.c.b16 %v1642, %v1640
        %v1709 = vpack.c.b16 %v1643, %v1641
        %v1710 = vpack.c.b16 %v1646, %v1644
        %v1711 = vpack.c.b16 %v1647, %v1645
        %v1712 = vpack.c.b16 %v1650, %v1648
        %v1713 = vpack.c.b16 %v1651, %v1649
        %v1714 = vpack.c.b16 %v1654, %v1652
        %v1715 = vpack.c.b16 %v1655, %v1653
        %v1716 = vpack.c.b16 %v1658, %v1656
        %v1717 = vpack.c.b16 %v1659, %v1657
        %v1718 = vpack.c.b16 %v1662, %v1660
        %v1719 = vpack.c.b16 %v1663, %v1661
        %v1720 = vpack.c.b16 %v1666, %v1664
        %v1721 = vpack.c.b16 %v1667, %v1665
        %v1722 = vpack.c.b16 %v1670, %v1668
        %v1723 = vpack.c.b16 %v1671, %v1669
        %v1724 = vpack.c.b16 %v1674, %v1672
        %v1725 = vpack.c.b16 %v1675, %v1673
        %v1726 = vpack.c.b16 %v1678, %v1676
        %v1727 = vpack.c.b16 %v1679, %v1677
        %1776 = vmatprep.subr.bf16.mxu0 %v1681
        %1777 = vmatpush1.bf16.msra.mxu0 %v1680
        %1778 = vmatprep.subr.bf16.mxu0 %v1683
        %1779 = vmatpush1.bf16.msra.mxu0 %v1682
        %1780 = vmatprep.subr.bf16.mxu0 %v1685
        %1781 = vmatpush1.bf16.msra.mxu0 %v1684
        %1782 = vmatprep.subr.bf16.mxu0 %v1687
        %1783 = vmatpush1.bf16.msra.mxu0 %v1686
        %1784 = vmatprep.subr.bf16.mxu0 %v1689
        %1785 = vmatpush1.bf16.msra.mxu0 %v1688
        %1786 = vmatprep.subr.bf16.mxu0 %v1691
        %1787 = vmatpush1.bf16.msra.mxu0 %v1690
        %1788 = vmatprep.subr.bf16.mxu0 %v1693
        %1789 = vmatpush1.bf16.msra.mxu0 %v1692
        %1790 = vmatprep.subr.bf16.mxu0 %v1695
        %1791 = vmatpush1.bf16.msra.mxu0 %v1694
        %1792 = vmatprep.subr.bf16.mxu0 %v1697
        %1793 = vmatpush1.bf16.msra.mxu0 %v1696
        %1794 = vmatprep.subr.bf16.mxu0 %v1699
        %1795 = vmatpush1.bf16.msra.mxu0 %v1698
        %1796 = vmatprep.subr.bf16.mxu0 %v1701
        %1797 = vmatpush1.bf16.msra.mxu0 %v1700
        %1798 = vmatprep.subr.bf16.mxu0 %v1703
        %1799 = vmatpush1.bf16.msra.mxu0 %v1702
        %1800 = vmatprep.subr.bf16.mxu0 %v1705
        %1801 = vmatpush1.bf16.msra.mxu0 %v1704
        %1802 = vmatprep.subr.bf16.mxu0 %v1707
        %1803 = vmatpush1.bf16.msra.mxu0 %v1706
        %1804 = vmatprep.subr.bf16.mxu0 %v1709
        %1805 = vmatpush1.bf16.msra.mxu0 %v1708
        %1806 = vmatprep.subr.bf16.mxu0 %v1711
        %1807 = vmatpush1.bf16.msra.mxu0 %v1710
        %1808 = vmatprep.mubr.bf16.mxu0 %v1429
        %1809 = vmatmul.mubr.bf16.gmra.mrb[0].mxu0 %v1428
        %v1810 = vpop.f32.mrb[0].mxu0
        %v1811 = vadd.f32 %v1529, %v1810
        %v1812 = vpop.f32.mrb[0].mxu0
        %v1813 = vadd.f32 %v1533, %v1812
        %v1814 = vpop.f32.mrb[0].mxu0
        %v1815 = vadd.f32 %v1529, %v1814
        %v1816 = vpop.f32.mrb[0].mxu0
        %v1817 = vadd.f32 %v1533, %v1816
        %1818 = vmatprep.mubr.bf16.mxu0 %v1431
        %1819 = vmatmul.mubr.bf16.gmra.mrb[0].mxu0 %v1430
        %v1820 = vpop.f32.mrb[0].mxu0
        %v1821 = vadd.f32 %v1529, %v1820
        %v1822 = vpop.f32.mrb[0].mxu0
        %v1823 = vadd.f32 %v1533, %v1822
        %v1824 = vpop.f32.mrb[0].mxu0
        %v1825 = vadd.f32 %v1529, %v1824
        %v1826 = vpop.f32.mrb[0].mxu0
        %v1827 = vadd.f32 %v1533, %v1826
        %1828 = vmatprep.mubr.bf16.mxu0 %v1433
        %1829 = vmatmul.mubr.bf16.gmra.mrb[0].mxu0 %v1432
        %v1830 = vpop.f32.mrb[0].mxu0
        %v1831 = vadd.f32 %v1529, %v1830
        %v1832 = vpop.f32.mrb[0].mxu0
        %v1833 = vadd.f32 %v1533, %v1832
        %v1834 = vpop.f32.mrb[0].mxu0
        %v1835 = vadd.f32 %v1529, %v1834
        %v1836 = vpop.f32.mrb[0].mxu0
        %v1837 = vadd.f32 %v1533, %v1836
        %1838 = vmatprep.mubr.bf16.mxu0 %v1435
        %1839 = vmatmul.mubr.bf16.gmra.mrb[0].mxu0 %v1434
        %v1840 = vpop.f32.mrb[0].mxu0
        %v1841 = vadd.f32 %v1529, %v1840
        %v1842 = vpop.f32.mrb[0].mxu0
        %v1843 = vadd.f32 %v1533, %v1842
        %v1844 = vpop.f32.mrb[0].mxu0
        %v1845 = vadd.f32 %v1529, %v1844
        %v1846 = vpop.f32.mrb[0].mxu0
        %v1847 = vadd.f32 %v1533, %v1846
        %1848 = vmatprep.mubr.bf16.mxu0 %v1437
        %1849 = vmatmul.mubr.bf16.gmra.mrb[0].mxu0 %v1436
        %v1850 = vpop.f32.mrb[0].mxu0
        %v1851 = vadd.f32 %v1529, %v1850
        %v1852 = vpop.f32.mrb[0].mxu0
        %v1853 = vadd.f32 %v1533, %v1852
        %v1854 = vpop.f32.mrb[0].mxu0
        %v1855 = vadd.f32 %v1529, %v1854
        %v1856 = vpop.f32.mrb[0].mxu0
        %v1857 = vadd.f32 %v1533, %v1856
        %1858 = vmatprep.mubr.bf16.mxu0 %v1439
        %1859 = vmatmul.mubr.bf16.gmra.mrb[0].mxu0 %v1438
        %v1860 = vpop.f32.mrb[0].mxu0
        %v1861 = vadd.f32 %v1529, %v1860
        %v1862 = vpop.f32.mrb[0].mxu0
        %v1863 = vadd.f32 %v1533, %v1862
        %v1864 = vpop.f32.mrb[0].mxu0
        %v1865 = vadd.f32 %v1529, %v1864
        %v1866 = vpop.f32.mrb[0].mxu0
        %v1867 = vadd.f32 %v1533, %v1866
        %1868 = vmatprep.mubr.bf16.mxu0 %v1441
        %1869 = vmatmul.mubr.bf16.gmra.mrb[0].mxu0 %v1440
        %v1870 = vpop.f32.mrb[0].mxu0
        %v1871 = vadd.f32 %v1529, %v1870
        %v1872 = vpop.f32.mrb[0].mxu0
        %v1873 = vadd.f32 %v1533, %v1872
        %v1874 = vpop.f32.mrb[0].mxu0
        %v1875 = vadd.f32 %v1529, %v1874
        %v1876 = vpop.f32.mrb[0].mxu0
        %v1877 = vadd.f32 %v1533, %v1876
        %1878 = vmatprep.mubr.bf16.mxu0 %v1443
        %1879 = vmatmul.mubr.bf16.gmra.mrb[0].mxu0 %v1442
        %v1880 = vpop.f32.mrb[0].mxu0
        %v1881 = vadd.f32 %v1529, %v1880
        %v1882 = vpop.f32.mrb[0].mxu0
        %v1883 = vadd.f32 %v1533, %v1882
        %v1884 = vpop.f32.mrb[0].mxu0
        %v1885 = vadd.f32 %v1529, %v1884
        %v1886 = vpop.f32.mrb[0].mxu0
        %v1887 = vadd.f32 %v1533, %v1886
        %1888 = vmatprep.mubr.bf16.mxu0 %v1445
        %1889 = vmatmul.mubr.bf16.gmra.mrb[0].mxu0 %v1444
        %v1890 = vpop.f32.mrb[0].mxu0
        %v1891 = vadd.f32 %v1529, %v1890
        %v1892 = vpop.f32.mrb[0].mxu0
        %v1893 = vadd.f32 %v1533, %v1892
        %v1894 = vpop.f32.mrb[0].mxu0
        %v1895 = vadd.f32 %v1529, %v1894
        %v1896 = vpop.f32.mrb[0].mxu0
        %v1897 = vadd.f32 %v1533, %v1896
        %1898 = vmatprep.mubr.bf16.mxu0 %v1447
        %1899 = vmatmul.mubr.bf16.gmra.mrb[0].mxu0 %v1446
        %v1900 = vpop.f32.mrb[0].mxu0
        %v1901 = vadd.f32 %v1529, %v1900
        %v1902 = vpop.f32.mrb[0].mxu0
        %v1903 = vadd.f32 %v1533, %v1902
        %v1904 = vpop.f32.mrb[0].mxu0
        %v1905 = vadd.f32 %v1529, %v1904
        %v1906 = vpop.f32.mrb[0].mxu0
        %v1907 = vadd.f32 %v1533, %v1906
        %1908 = vmatprep.mubr.bf16.mxu0 %v1449
        %1909 = vmatmul.mubr.bf16.gmra.mrb[0].mxu0 %v1448
        %v1910 = vpop.f32.mrb[0].mxu0
        %v1911 = vadd.f32 %v1529, %v1910
        %v1912 = vpop.f32.mrb[0].mxu0
        %v1913 = vadd.f32 %v1533, %v1912
        %v1914 = vpop.f32.mrb[0].mxu0
        %v1915 = vadd.f32 %v1529, %v1914
        %v1916 = vpop.f32.mrb[0].mxu0
        %v1917 = vadd.f32 %v1533, %v1916
        %1918 = vmatprep.mubr.bf16.mxu0 %v1451
        %1919 = vmatmul.mubr.bf16.gmra.mrb[0].mxu0 %v1450
        %v1920 = vpop.f32.mrb[0].mxu0
        %v1921 = vadd.f32 %v1529, %v1920
        %v1922 = vpop.f32.mrb[0].mxu0
        %v1923 = vadd.f32 %v1533, %v1922
        %v1924 = vpop.f32.mrb[0].mxu0
        %v1925 = vadd.f32 %v1529, %v1924
        %v1926 = vpop.f32.mrb[0].mxu0
        %v1927 = vadd.f32 %v1533, %v1926
        %1928 = vmatprep.mubr.bf16.mxu0 %v1453
        %1929 = vmatmul.mubr.bf16.gmra.mrb[0].mxu0 %v1452
        %v1930 = vpop.f32.mrb[0].mxu0
        %v1931 = vadd.f32 %v1529, %v1930
        %v1932 = vpop.f32.mrb[0].mxu0
        %v1933 = vadd.f32 %v1533, %v1932
        %v1934 = vpop.f32.mrb[0].mxu0
        %v1935 = vadd.f32 %v1529, %v1934
        %v1936 = vpop.f32.mrb[0].mxu0
        %v1937 = vadd.f32 %v1533, %v1936
        %1938 = vmatprep.mubr.bf16.mxu0 %v1455
        %1939 = vmatmul.mubr.bf16.gmra.mrb[0].mxu0 %v1454
        %v1940 = vpop.f32.mrb[0].mxu0
        %v1941 = vadd.f32 %v1529, %v1940
        %v1942 = vpop.f32.mrb[0].mxu0
        %v1943 = vadd.f32 %v1533, %v1942
        %v1944 = vpop.f32.mrb[0].mxu0
        %v1945 = vadd.f32 %v1529, %v1944
        %v1946 = vpop.f32.mrb[0].mxu0
        %v1947 = vadd.f32 %v1533, %v1946
        %1948 = vmatprep.mubr.bf16.mxu0 %v1457
        %1949 = vmatmul.mubr.bf16.gmra.mrb[0].mxu0 %v1456
        %v1950 = vpop.f32.mrb[0].mxu0
        %v1951 = vadd.f32 %v1529, %v1950
        %v1952 = vpop.f32.mrb[0].mxu0
        %v1953 = vadd.f32 %v1533, %v1952
        %v1954 = vpop.f32.mrb[0].mxu0
        %v1955 = vadd.f32 %v1529, %v1954
        %v1956 = vpop.f32.mrb[0].mxu0
        %v1957 = vadd.f32 %v1533, %v1956
        %1958 = vmatprep.mubr.bf16.mxu0 %v1459
        %1959 = vmatmul.mubr.bf16.gmra.mrb[0].mxu0 %v1458
        %v1960 = vpop.f32.mrb[0].mxu0
        %v1961 = vadd.f32 %v1529, %v1960
        %v1962 = vpop.f32.mrb[0].mxu0
        %v1963 = vadd.f32 %v1533, %v1962
        %v1964 = vpop.f32.mrb[0].mxu0
        %v1965 = vadd.f32 %v1529, %v1964
        %v1966 = vpop.f32.mrb[0].mxu0
        %v1967 = vadd.f32 %v1533, %v1966
        %1968 = vdwg.mxu0
        %1969 = vmatprep.subr.bf16.mxu0 %v1713
        %1970 = vmatpush1.bf16.msra.mxu0 %v1712
        %1971 = vmatprep.subr.bf16.mxu0 %v1715
        %1972 = vmatpush1.bf16.msra.mxu0 %v1714
        %1973 = vmatprep.subr.bf16.mxu0 %v1717
        %1974 = vmatpush1.bf16.msra.mxu0 %v1716
        %1975 = vmatprep.subr.bf16.mxu0 %v1719
        %1976 = vmatpush1.bf16.msra.mxu0 %v1718
        %1977 = vmatprep.subr.bf16.mxu0 %v1721
        %1978 = vmatpush1.bf16.msra.mxu0 %v1720
        %1979 = vmatprep.subr.bf16.mxu0 %v1723
        %1980 = vmatpush1.bf16.msra.mxu0 %v1722
        %1981 = vmatprep.subr.bf16.mxu0 %v1725
        %1982 = vmatpush1.bf16.msra.mxu0 %v1724
        %1983 = vmatprep.subr.bf16.mxu0 %v1727
        %1984 = vmatpush1.bf16.msra.mxu0 %v1726
        %1985 = vmatprep.subr.bf16.mxu0 0
        %1986 = vmatpush1.bf16.msra.mxu0 0
        %1987 = vmatprep.subr.bf16.mxu0 0
        %1988 = vmatpush1.bf16.msra.mxu0 0
        %1989 = vmatprep.subr.bf16.mxu0 0
        %1990 = vmatpush1.bf16.msra.mxu0 0
        %1991 = vmatprep.subr.bf16.mxu0 0
        %1992 = vmatpush1.bf16.msra.mxu0 0
        %1993 = vmatprep.subr.bf16.mxu0 0
        %1994 = vmatpush1.bf16.msra.mxu0 0
        %1995 = vmatprep.subr.bf16.mxu0 0
        %1996 = vmatpush1.bf16.msra.mxu0 0
        %1997 = vmatprep.subr.bf16.mxu0 0
        %1998 = vmatpush1.bf16.msra.mxu0 0
        %1999 = vmatprep.subr.bf16.mxu0 0
        %2000 = vmatpush1.bf16.msra.mxu0 0
        %2001 = vmatprep.mubr.bf16.mxu0 0
        %2002 = vmatmul.mubr.bf16.gmra.mrb[0].mxu0 %v1460
        %v2003 = vpop.f32.mrb[0].mxu0
        %v2004 = vadd.f32 %v1811, %v2003
        %v2005 = vpop.f32.mrb[0].mxu0
        %v2006 = vadd.f32 %v1813, %v2005
        %v2007 = vpop.f32.mrb[0].mxu0
        %v2008 = vadd.f32 %v1815, %v2007
        %v2009 = vpop.f32.mrb[0].mxu0
        %v2010 = vadd.f32 %v1817, %v2009
        %2011 = vmatprep.mubr.bf16.mxu0 0
        %2012 = vmatmul.mubr.bf16.gmra.mrb[0].mxu0 %v1461
        %v2013 = vpop.f32.mrb[0].mxu0
        %v2014 = vadd.f32 %v1821, %v2013
        %v2015 = vpop.f32.mrb[0].mxu0
        %v2016 = vadd.f32 %v1823, %v2015
        %v2017 = vpop.f32.mrb[0].mxu0
        %v2018 = vadd.f32 %v1825, %v2017
        %v2019 = vpop.f32.mrb[0].mxu0
        %v2020 = vadd.f32 %v1827, %v2019
        %2021 = vmatprep.mubr.bf16.mxu0 0
        %2022 = vmatmul.mubr.bf16.gmra.mrb[0].mxu0 %v1462
        %v2023 = vpop.f32.mrb[0].mxu0
        %v2024 = vadd.f32 %v1831, %v2023
        %v2025 = vpop.f32.mrb[0].mxu0
        %v2026 = vadd.f32 %v1833, %v2025
        %v2027 = vpop.f32.mrb[0].mxu0
        %v2028 = vadd.f32 %v1835, %v2027
        %v2029 = vpop.f32.mrb[0].mxu0
        %v2030 = vadd.f32 %v1837, %v2029
        %2031 = vmatprep.mubr.bf16.mxu0 0
        %2032 = vmatmul.mubr.bf16.gmra.mrb[0].mxu0 %v1463
        %v2033 = vpop.f32.mrb[0].mxu0
        %v2034 = vadd.f32 %v1841, %v2033
        %v2035 = vpop.f32.mrb[0].mxu0
        %v2036 = vadd.f32 %v1843, %v2035
        %v2037 = vpop.f32.mrb[0].mxu0
        %v2038 = vadd.f32 %v1845, %v2037
        %v2039 = vpop.f32.mrb[0].mxu0
        %v2040 = vadd.f32 %v1847, %v2039
        %2041 = vmatprep.mubr.bf16.mxu0 0
        %2042 = vmatmul.mubr.bf16.gmra.mrb[0].mxu0 %v1464
        %v2043 = vpop.f32.mrb[0].mxu0
        %v2044 = vadd.f32 %v1851, %v2043
        %v2045 = vpop.f32.mrb[0].mxu0
        %v2046 = vadd.f32 %v1853, %v2045
        %v2047 = vpop.f32.mrb[0].mxu0
        %v2048 = vadd.f32 %v1855, %v2047
        %v2049 = vpop.f32.mrb[0].mxu0
        %v2050 = vadd.f32 %v1857, %v2049
        %2051 = vmatprep.mubr.bf16.mxu0 0
        %2052 = vmatmul.mubr.bf16.gmra.mrb[0].mxu0 %v1465
        %v2053 = vpop.f32.mrb[0].mxu0
        %v2054 = vadd.f32 %v1861, %v2053
        %v2055 = vpop.f32.mrb[0].mxu0
        %v2056 = vadd.f32 %v1863, %v2055
        %v2057 = vpop.f32.mrb[0].mxu0
        %v2058 = vadd.f32 %v1865, %v2057
        %v2059 = vpop.f32.mrb[0].mxu0
        %v2060 = vadd.f32 %v1867, %v2059
        %2061 = vmatprep.mubr.bf16.mxu0 0
        %2062 = vmatmul.mubr.bf16.gmra.mrb[0].mxu0 %v1466
        %v2063 = vpop.f32.mrb[0].mxu0
        %v2064 = vadd.f32 %v1871, %v2063
        %v2065 = vpop.f32.mrb[0].mxu0
        %v2066 = vadd.f32 %v1873, %v2065
        %v2067 = vpop.f32.mrb[0].mxu0
        %v2068 = vadd.f32 %v1875, %v2067
        %v2069 = vpop.f32.mrb[0].mxu0
        %v2070 = vadd.f32 %v1877, %v2069
        %2071 = vmatprep.mubr.bf16.mxu0 0
        %2072 = vmatmul.mubr.bf16.gmra.mrb[0].mxu0 %v1467
        %v2073 = vpop.f32.mrb[0].mxu0
        %v2074 = vadd.f32 %v1881, %v2073
        %v2075 = vpop.f32.mrb[0].mxu0
        %v2076 = vadd.f32 %v1883, %v2075
        %v2077 = vpop.f32.mrb[0].mxu0
        %v2078 = vadd.f32 %v1885, %v2077
        %v2079 = vpop.f32.mrb[0].mxu0
        %v2080 = vadd.f32 %v1887, %v2079
        %2081 = vmatprep.mubr.bf16.mxu0 0
        %2082 = vmatmul.mubr.bf16.gmra.mrb[0].mxu0 %v1468
        %v2083 = vpop.f32.mrb[0].mxu0
        %v2084 = vadd.f32 %v1891, %v2083
        %v2085 = vpop.f32.mrb[0].mxu0
        %v2086 = vadd.f32 %v1893, %v2085
        %v2087 = vpop.f32.mrb[0].mxu0
        %v2088 = vadd.f32 %v1895, %v2087
        %v2089 = vpop.f32.mrb[0].mxu0
        %v2090 = vadd.f32 %v1897, %v2089
        %2091 = vmatprep.mubr.bf16.mxu0 0
        %2092 = vmatmul.mubr.bf16.gmra.mrb[0].mxu0 %v1469
        %v2093 = vpop.f32.mrb[0].mxu0
        %v2094 = vadd.f32 %v1901, %v2093
        %v2095 = vpop.f32.mrb[0].mxu0
        %v2096 = vadd.f32 %v1903, %v2095
        %v2097 = vpop.f32.mrb[0].mxu0
        %v2098 = vadd.f32 %v1905, %v2097
        %v2099 = vpop.f32.mrb[0].mxu0
        %v2100 = vadd.f32 %v1907, %v2099
        %2101 = vmatprep.mubr.bf16.mxu0 0
        %2102 = vmatmul.mubr.bf16.gmra.mrb[0].mxu0 %v1470
        %v2103 = vpop.f32.mrb[0].mxu0
        %v2104 = vadd.f32 %v1911, %v2103
        %v2105 = vpop.f32.mrb[0].mxu0
        %v2106 = vadd.f32 %v1913, %v2105
        %v2107 = vpop.f32.mrb[0].mxu0
        %v2108 = vadd.f32 %v1915, %v2107
        %v2109 = vpop.f32.mrb[0].mxu0
        %v2110 = vadd.f32 %v1917, %v2109
        %2111 = vmatprep.mubr.bf16.mxu0 0
        %2112 = vmatmul.mubr.bf16.gmra.mrb[0].mxu0 %v1471
        %v2113 = vpop.f32.mrb[0].mxu0
        %v2114 = vadd.f32 %v1921, %v2113
        %v2115 = vpop.f32.mrb[0].mxu0
        %v2116 = vadd.f32 %v1923, %v2115
        %v2117 = vpop.f32.mrb[0].mxu0
        %v2118 = vadd.f32 %v1925, %v2117
        %v2119 = vpop.f32.mrb[0].mxu0
        %v2120 = vadd.f32 %v1927, %v2119
        %2121 = vmatprep.mubr.bf16.mxu0 0
        %2122 = vmatmul.mubr.bf16.gmra.mrb[0].mxu0 %v1472
        %v2123 = vpop.f32.mrb[0].mxu0
        %v2124 = vadd.f32 %v1931, %v2123
        %v2125 = vpop.f32.mrb[0].mxu0
        %v2126 = vadd.f32 %v1933, %v2125
        %v2127 = vpop.f32.mrb[0].mxu0
        %v2128 = vadd.f32 %v1935, %v2127
        %v2129 = vpop.f32.mrb[0].mxu0
        %v2130 = vadd.f32 %v1937, %v2129
        %2131 = vmatprep.mubr.bf16.mxu0 0
        %2132 = vmatmul.mubr.bf16.gmra.mrb[0].mxu0 %v1473
        %v2133 = vpop.f32.mrb[0].mxu0
        %v2134 = vadd.f32 %v1941, %v2133
        %v2135 = vpop.f32.mrb[0].mxu0
        %v2136 = vadd.f32 %v1943, %v2135
        %v2137 = vpop.f32.mrb[0].mxu0
        %v2138 = vadd.f32 %v1945, %v2137
        %v2139 = vpop.f32.mrb[0].mxu0
        %v2140 = vadd.f32 %v1947, %v2139
        %2141 = vmatprep.mubr.bf16.mxu0 0
        %2142 = vmatmul.mubr.bf16.gmra.mrb[0].mxu0 %v1474
        %v2143 = vpop.f32.mrb[0].mxu0
        %v2144 = vadd.f32 %v1951, %v2143
        %v2145 = vpop.f32.mrb[0].mxu0
        %v2146 = vadd.f32 %v1953, %v2145
        %v2147 = vpop.f32.mrb[0].mxu0
        %v2148 = vadd.f32 %v1955, %v2147
        %v2149 = vpop.f32.mrb[0].mxu0
        %v2150 = vadd.f32 %v1957, %v2149
        %2151 = vmatprep.mubr.bf16.mxu0 0
        %2152 = vmatmul.mubr.bf16.gmra.mrb[0].mxu0 %v1475
        %v2153 = vpop.f32.mrb[0].mxu0
        %v2154 = vadd.f32 %v1961, %v2153
        %v2155 = vpop.f32.mrb[0].mxu0
        %v2156 = vadd.f32 %v1963, %v2155
        %v2157 = vpop.f32.mrb[0].mxu0
        %v2158 = vadd.f32 %v1965, %v2157
        %v2159 = vpop.f32.mrb[0].mxu0
        %v2160 = vadd.f32 %v1967, %v2159
        %2161 = vdwg.mxu0
        %2162 = vst [vmem:[%s325] sm:$0xff] %v2004
        %2163 = vst [vmem:[%s325 + $0x8] sm:$0xff] %v2006
        %2164 = vst [vmem:[%s325 + $0x10] sm:$0xff] %v2008
        %2165 = vst [vmem:[%s325 + $0x18] sm:$0xff] %v2010
        %2166 = vst [vmem:[%s325 + $0x20] sm:$0xff] %v2014
        %2167 = vst [vmem:[%s325 + $0x28] sm:$0xff] %v2016
        %2168 = vst [vmem:[%s325 + $0x30] sm:$0xff] %v2018
        %2169 = vst [vmem:[%s325 + $0x38] sm:$0xff] %v2020
        %2170 = vst [vmem:[%s325 + $0x40] sm:$0xff] %v2024
        %2171 = vst [vmem:[%s325 + $0x48] sm:$0xff] %v2026
        %2172 = vst [vmem:[%s325 + $0x50] sm:$0xff] %v2028
        %2173 = vst [vmem:[%s325 + $0x58] sm:$0xff] %v2030
        %2174 = vst [vmem:[%s325 + $0x60] sm:$0xff] %v2034
        %2175 = vst [vmem:[%s325 + $0x68] sm:$0xff] %v2036
        %2176 = vst [vmem:[%s325 + $0x70] sm:$0xff] %v2038
        %2177 = vst [vmem:[%s325 + $0x78] sm:$0xff] %v2040
        %2178 = vst [vmem:[%s325 + $0x80] sm:$0xff] %v2044
        %2179 = vst [vmem:[%s325 + $0x88] sm:$0xff] %v2046
        %2180 = vst [vmem:[%s325 + $0x90] sm:$0xff] %v2048
        %2181 = vst [vmem:[%s325 + $0x98] sm:$0xff] %v2050
        %2182 = vst [vmem:[%s325 + $0xa0] sm:$0xff] %v2054
        %2183 = vst [vmem:[%s325 + $0xa8] sm:$0xff] %v2056
        %2184 = vst [vmem:[%s325 + $0xb0] sm:$0xff] %v2058
        %2185 = vst [vmem:[%s325 + $0xb8] sm:$0xff] %v2060
        %2186 = vst [vmem:[%s325 + $0xc0] sm:$0xff] %v2064
        %2187 = vst [vmem:[%s325 + $0xc8] sm:$0xff] %v2066
        %2188 = vst [vmem:[%s325 + $0xd0] sm:$0xff] %v2068
        %2189 = vst [vmem:[%s325 + $0xd8] sm:$0xff] %v2070
        %2190 = vst [vmem:[%s325 + $0xe0] sm:$0xff] %v2074
        %2191 = vst [vmem:[%s325 + $0xe8] sm:$0xff] %v2076
        %2192 = vst [vmem:[%s325 + $0xf0] sm:$0xff] %v2078
        %2193 = vst [vmem:[%s325 + $0xf8] sm:$0xff] %v2080
        %2194 = vst [vmem:[%s325 + $0x100] sm:$0xff] %v2084
        %2195 = vst [vmem:[%s325 + $0x108] sm:$0xff] %v2086
        %2196 = vst [vmem:[%s325 + $0x110] sm:$0xff] %v2088
        %2197 = vst [vmem:[%s325 + $0x118] sm:$0xff] %v2090
        %2198 = vst [vmem:[%s325 + $0x120] sm:$0xff] %v2094
        %2199 = vst [vmem:[%s325 + $0x128] sm:$0xff] %v2096
        %2200 = vst [vmem:[%s325 + $0x130] sm:$0xff] %v2098
        %2201 = vst [vmem:[%s325 + $0x138] sm:$0xff] %v2100
        %2202 = vst [vmem:[%s325 + $0x140] sm:$0xff] %v2104
        %2203 = vst [vmem:[%s325 + $0x148] sm:$0xff] %v2106
        %2204 = vst [vmem:[%s325 + $0x150] sm:$0xff] %v2108
        %2205 = vst [vmem:[%s325 + $0x158] sm:$0xff] %v2110
        %2206 = vst [vmem:[%s325 + $0x160] sm:$0xff] %v2114
        %2207 = vst [vmem:[%s325 + $0x168] sm:$0xff] %v2116
        %2208 = vst [vmem:[%s325 + $0x170] sm:$0xff] %v2118
        %2209 = vst [vmem:[%s325 + $0x178] sm:$0xff] %v2120
        %2210 = vst [vmem:[%s325 + $0x180] sm:$0xff] %v2124
        %2211 = vst [vmem:[%s325 + $0x188] sm:$0xff] %v2126
        %2212 = vst [vmem:[%s325 + $0x190] sm:$0xff] %v2128
        %2213 = vst [vmem:[%s325 + $0x198] sm:$0xff] %v2130
        %2214 = vst [vmem:[%s325 + $0x1a0] sm:$0xff] %v2134
        %2215 = vst [vmem:[%s325 + $0x1a8] sm:$0xff] %v2136
        %2216 = vst [vmem:[%s325 + $0x1b0] sm:$0xff] %v2138
        %2217 = vst [vmem:[%s325 + $0x1b8] sm:$0xff] %v2140
        %2218 = vst [vmem:[%s325 + $0x1c0] sm:$0xff] %v2144
        %2219 = vst [vmem:[%s325 + $0x1c8] sm:$0xff] %v2146
        %2220 = vst [vmem:[%s325 + $0x1d0] sm:$0xff] %v2148
        %2221 = vst [vmem:[%s325 + $0x1d8] sm:$0xff] %v2150
        %2222 = vst [vmem:[%s325 + $0x1e0] sm:$0xff] %v2154
        %2223 = vst [vmem:[%s325 + $0x1e8] sm:$0xff] %v2156
        %2224 = vst [vmem:[%s325 + $0x1f0] sm:$0xff] %v2158
        %2225 = vst [vmem:[%s325 + $0x1f8] sm:$0xff] %v2160
        %s2226 = sand.u32 %s185, 1
        %s2227 = scalar_lea.sflag [#allocation4], %s2226
        %s2228 = sand.u32 %s185, 1
        %s2229 = smul.addr %s2228, 512
        %s2230 = scalar_lea.vmem [#allocation8], %s2229
        // Predicated region
        $region61: #{tpu_custom_call.1} parent=47 // pred_check
          %p2231 = pneg %p195
        $region62: #{tpu_custom_call.1} parent=47 // pred_check_branch
          %2233 = sbr.rel (%p2231) target = $region64
        $region63: #{tpu_custom_call.1} parent=47 // pred_region
          %s2234 = smul.u32 32, %s25
          %s2236 = ssub.s32 8192, 8192
          %2237 = vsyncadd %s2227, %s2236
          %s2238 = smul.addr %s2234, 2
          %s2239 = smul.addr %s2238, 128
          %s2240 = scalar_lea.hbm %s7, %s2239
          %s2241 = sshll.u32 %s2230, 4
          %s2242 = int_to_ptr.vmem [resolvable:$true] %s2241
          %2247 = dma.vmem_to_hbm [thread:$0]  %s2242, 8192, %s2240, %s2227, 256, 256, 16
        $region64: #{tpu_custom_call.1} parent=47 // pred_fallthru
          _
      $region48: #{tpu_custom_call.1} parent=5 // pred_fallthru
        _
      %p2248 = scmp.le.s32.totalorder 2, %s20
      // Predicated region
      $region65: #{tpu_custom_call.1} parent=5 // pred_check
        %p2249 = pneg %p2248
      $region66: #{tpu_custom_call.1} parent=5 // pred_check_branch
        %2251 = sbr.rel (%p2249) target = $region68
      $region67: #{tpu_custom_call.1} parent=5 // pred_region
        %s2252 = ssub.s32 %s20, 2
        // Predicated region
        $region69: #{tpu_custom_call.1} parent=67 // pred_check
          %p2253 = pneg %p201
        $region70: #{tpu_custom_call.1} parent=67 // pred_check_branch
          %2255 = sbr.rel (%p2253) target = $region72
        $region71: #{tpu_custom_call.1} parent=67 // pred_region
          %s2256 = sand.u32 %s186, 1
          %s2257 = scalar_lea.sflag [#allocation4], %s2256
          %s2258 = sand.u32 %s186, 1
          %s2259 = smul.addr %s2258, 512
          %s2260 = scalar_lea.vmem [#allocation8], %s2259
          %2261 = dma.done %s2257, 8192
        $region72: #{tpu_custom_call.1} parent=67 // pred_fallthru
          _
      $region68: #{tpu_custom_call.1} parent=5 // pred_fallthru
        _
    $region6: #{tpu_custom_call.1} parent=1 // loop_footer
      %s24 = sadd.s32 1, %s20
    $region7: #{tpu_custom_call.1} parent=1 // loop_footer_branch
      %19 = sbr.rel target = $region3
    $region8: #{tpu_custom_call.1} parent=1 // loop_exit
      _
    %2262 = vsyncpa [#allocation3], 1
    %s2263 = scalar_lea.sflag [#allocation3], 1
    %2264 = vsyncpa %s2263, 1
    %2265 = vsyncpa [#allocation6], 1
    %2266 = vsyncpa [#allocation4], 1
    %s2267 = scalar_lea.sflag [#allocation4], 1
    %2268 = vsyncpa %s2267, 1

</llo_original>
